<compile_context>
chip_gen: v6e
topology: v6e:2x2x1
jax: 0.10.0
libtpu: 0.0.40
codegen_flags: <defaults>
</compile_context>

<pallas_src>
import functools

import jax
import jax.numpy as jnp
import numpy as np
from jax.experimental import pallas as pl
from jax.experimental.pallas import tpu as pltpu


def _round_up(v, m):
    return -(-v // m) * m


# ----------------------------------------------------------------------------
# Fused kernel.  Every activation is a (C, Lp) slab, Lp = padded half-resolution
# length (multiple of 128).  Even/odd output phases are produced separately:
#   o_ref[b, k, c, l] == decoder_out[b, c, 2*l + k]
# ----------------------------------------------------------------------------
def _decoder_kernel(x_ref, skip_ref, uw_ref, bt_ref, w1_ref, b1_ref, w2_ref,
                    b2_ref, o_ref, *, L_valid):
    Bblk = x_ref.shape[0]
    out_cp = o_ref.shape[2]
    Lp = x_ref.shape[-1]
    cdt = x_ref.dtype                       # matmul operand dtype (bf16 or f32)

    lane = jax.lax.broadcasted_iota(jnp.int32, (out_cp, Lp), 1)
    valid = lane < L_valid                  # true signal occupies lanes [0, L_valid)
    first = lane == 0
    last = lane == (Lp - 1)

    def shift_r(a):                         # b[:, l] = a[:, l-1], zero at l = 0
        return jnp.where(first, 0.0, pltpu.roll(a, 1, 1))

    def shift_l(a):                         # b[:, l] = a[:, l+1], zero at l = Lp-1
        return jnp.where(last, 0.0, pltpu.roll(a, Lp - 1, 1))

    def mm(w, a):
        return jnp.dot(w, a, preferred_element_type=jnp.float32)

    # Hoist weight / bias loads out of the batch loop (one vld each).
    uw = uw_ref[...]                        # (2*out_cp, in_cp)   compute dtype
    w1 = w1_ref[...]                        # (out_cp, 6*out_cp)  compute dtype
    w2 = w2_ref[...]                        # (out_cp, 3*out_cp)  compute dtype
    bt2 = bt_ref[...]                       # (2*out_cp, 1)       f32
    b1 = b1_ref[...]                        # (out_cp, 1)         f32
    b2 = b2_ref[...]                        # (out_cp, 1)         f32

    def sample(b):
        x = x_ref[b]                                   # (in_cp, Lp) compute dtype
        ske = skip_ref[b, 0].astype(jnp.float32)       # skip even phase
        sko = skip_ref[b, 1].astype(jnp.float32)       # skip odd phase

        # ConvTranspose1d(k=2, stride=2): both output phases in ONE matmul.
        u = mm(uw, x) + bt2                            # (2*out_cp, Lp) f32
        u0 = jnp.where(valid, u[:out_cp], 0.0)         # mask bias leak in the tail
        u1 = jnp.where(valid, u[out_cp:], 0.0)

        # conv1 (k=3, pad=1) on cat([up, skip]) in even/odd polyphase form,
        # taps stacked along the contraction dim -> ONE matmul per phase.
        a_e = jnp.concatenate(
            [shift_r(u1), u0, u1, shift_r(sko), ske, sko], axis=0).astype(cdt)
        a_o = jnp.concatenate(
            [u0, u1, shift_l(u0), ske, sko, shift_l(ske)], axis=0).astype(cdt)
        he = jnp.where(valid, jnp.maximum(mm(w1, a_e) + b1, 0.0), 0.0)
        ho = jnp.where(valid, jnp.maximum(mm(w1, a_o) + b1, 0.0), 0.0)

        # conv2 (k=3, pad=1) + ReLU, same tap-stacking.
        c_e = jnp.concatenate([shift_r(ho), he, ho], axis=0).astype(cdt)
        c_o = jnp.concatenate([he, ho, shift_l(he)], axis=0).astype(cdt)
        oe = jnp.where(valid, jnp.maximum(mm(w2, c_e) + b2, 0.0), 0.0)
        oo = jnp.where(valid, jnp.maximum(mm(w2, c_o) + b2, 0.0), 0.0)

        o_ref[b, 0] = oe.astype(o_ref.dtype)
        o_ref[b, 1] = oo.astype(o_ref.dtype)

    if Bblk == 1:
        sample(0)
    else:
        def body(b, carry):
            sample(b)
            return carry
        jax.lax.fori_loop(0, Bblk, body, 0, unroll=(Bblk <= 2))


# ----------------------------------------------------------------------------
# One-time parameter preparation (kernel layout + dtype); do NOT redo per call.
# ----------------------------------------------------------------------------
def prepare_decoder_params(params, compute_dtype=jnp.bfloat16):
    Wt = jnp.asarray(params["Wt"], jnp.float32)   # (in_c, out_c, 2)  ConvTranspose1d
    bt = jnp.asarray(params["bt"], jnp.float32)   # (out_c,)
    W1 = jnp.asarray(params["W1"], jnp.float32)   # (out_c, 2*out_c, 3)
    b1 = jnp.asarray(params["b1"], jnp.float32)   # (out_c,)
    W2 = jnp.asarray(params["W2"], jnp.float32)   # (out_c, out_c, 3)
    b2 = jnp.asarray(params["b2"], jnp.float32)   # (out_c,)

    in_c, out_c, _ = Wt.shape
    cdt = jnp.dtype(compute_dtype)
    gran = 8 if cdt == jnp.dtype(jnp.float32) else 16   # sublane granule
    in_cp = _round_up(in_c, gran)
    out_cp = _round_up(out_c, gran)

    def pad2(w, r, c):
        return jnp.pad(w, ((0, r - w.shape[0]), (0, c - w.shape[1])))

    # ConvTranspose1d: phase-k weight is Wt[:, :, k].T : (out_c, in_c); stack phases.
    uw = jnp.concatenate([pad2(Wt[:, :, k].T, out_cp, in_cp) for k in (0, 1)], axis=0)
    bt2 = jnp.concatenate([jnp.pad(bt, (0, out_cp - out_c))] * 2).reshape(2 * out_cp, 1)

    # conv1: taps stacked along K, order = [up tap0..2, skip tap0..2]
    # (matches the activation stack built in the kernel).
    w1_blocks = ([pad2(W1[:, :out_c, k], out_cp, out_cp) for k in range(3)]
                 + [pad2(W1[:, out_c:, k], out_cp, out_cp) for k in range(3)])
    w1s = jnp.concatenate(w1_blocks, axis=1)                       # (out_cp, 6*out_cp)
    b1p = jnp.pad(b1, (0, out_cp - out_c)).reshape(out_cp, 1)

    # conv2: taps stacked along K, order = [tap0, tap1, tap2].
    w2s = jnp.concatenate([pad2(W2[:, :, k], out_cp, out_cp) for k in range(3)], axis=1)
    b2p = jnp.pad(b2, (0, out_cp - out_c)).reshape(out_cp, 1)

    return {
        "uw": uw.astype(cdt), "bt2": bt2,
        "w1s": w1s.astype(cdt), "b1": b1p,
        "w2s": w2s.astype(cdt), "b2": b2p,
        "in_c": in_c, "out_c": out_c, "in_cp": in_cp, "out_cp": out_cp,
        "compute_dtype": cdt,
    }


# ----------------------------------------------------------------------------
# decoder_block forward
# ----------------------------------------------------------------------------
def decoder_block_forward(kp, x, skip, batch_block=None, out_dtype=None):
    N, in_c, L = x.shape
    out_c, out_cp, in_cp = kp["out_c"], kp["out_cp"], kp["in_cp"]
    cdt = kp["compute_dtype"]
    if out_dtype is None:
        out_dtype = cdt
    assert in_c == kp["in_c"]
    assert skip.shape == (N, out_c, 2 * L)

    Lp = _round_up(L, 128)                       # lane-dense phase length

    # x -> (N, in_cp, Lp), compute dtype (halves HBM traffic for bf16).
    x_p = x.astype(cdt)
    if (in_cp, Lp) != (in_c, L):
        x_p = jnp.pad(x_p, ((0, 0), (0, in_cp - in_c), (0, Lp - L)))

    # skip -> (N, 2, out_cp, Lp): phase k holds skip[..., k::2], zero padded.
    skip_r = skip.astype(cdt).reshape(N, out_c, L, 2)
    if (out_cp, Lp) != (out_c, L):
        skip_r = jnp.pad(skip_r, ((0, 0), (0, out_cp - out_c), (0, Lp - L), (0, 0)))
    skip_p = jnp.transpose(skip_r, (0, 3, 1, 2))

    # Auto-size the batch block against a VMEM budget; keep >= 2 grid steps so
    # both v7x TensorCores get work on the "parallel" axis.
    if batch_block is None:
        isz = jnp.dtype(cdt).itemsize
        osz = jnp.dtype(out_dtype).itemsize
        per_sample = 2 * (in_cp * Lp * isz            # x  (double-buffered)
                          + 2 * out_cp * Lp * isz     # skip
                          + 2 * out_cp * Lp * osz)    # out
        temps = 20 * out_cp * Lp * 4                  # in-kernel f32 working set
        budget = max(24 * 1024 * 1024 - temps, per_sample)
        bb = max(1, min(N, budget // max(per_sample, 1)))
        if N >= 2:
            bb = min(bb, N // 2)
        while bb > 1 and N % bb:
            bb -= 1
        batch_block = max(bb, 1)
    assert N % batch_block == 0

    kernel = functools.partial(_decoder_kernel, L_valid=L)
    out_p = pl.pallas_call(
        kernel,
        out_shape=jax.ShapeDtypeStruct((N, 2, out_cp, Lp), out_dtype),
        grid=(N // batch_block,),
        in_specs=[
            pl.BlockSpec((batch_block, in_cp, Lp), lambda n: (n, 0, 0)),
            pl.BlockSpec((batch_block, 2, out_cp, Lp), lambda n: (n, 0, 0, 0)),
            pl.BlockSpec((2 * out_cp, in_cp), lambda n: (0, 0)),
            pl.BlockSpec((2 * out_cp, 1), lambda n: (0, 0)),
            pl.BlockSpec((out_cp, 6 * out_cp), lambda n: (0, 0)),
            pl.BlockSpec((out_cp, 1), lambda n: (0, 0)),
            pl.BlockSpec((out_cp, 3 * out_cp), lambda n: (0, 0)),
            pl.BlockSpec((out_cp, 1), lambda n: (0, 0)),
        ],
        out_specs=pl.BlockSpec((batch_block, 2, out_cp, Lp), lambda n: (n, 0, 0, 0)),
        compiler_params=pltpu.CompilerParams(
            dimension_semantics=("parallel",),
            vmem_limit_bytes=48 * 1024 * 1024,   # safe on v5e/v6e (128 MiB) & v7x (64 MiB)
        ),
    )(x_p, skip_p, kp["uw"], kp["bt2"], kp["w1s"], kp["b1"], kp["w2s"], kp["b2"])

    # Interleave even/odd output phases (single XLA pass; see TODO above).
    out = jnp.transpose(out_p[:, :, :out_c, :], (0, 2, 3, 1)).reshape(N, out_c, 2 * Lp)
    return out[:, :, : 2 * L]


# ----------------------------------------------------------------------------
# Pure-JAX reference (matches PyTorch semantics, eval-mode dropout = identity)
# ----------------------------------------------------------------------------
def reference(params, x, skip):
    Wt, bt = params["Wt"], params["bt"]
    W1, b1 = params["W1"], params["b1"]
    W2, b2 = params["W2"], params["b2"]
    N, in_c, L = x.shape
    out_c = Wt.shape[1]

    up = jnp.einsum("nil,iok->nolk", x, Wt).reshape(N, out_c, 2 * L) + bt[None, :, None]
    c = jnp.concatenate([up, skip], axis=1)

    def conv1d(xx, W, b):
        T = xx.shape[-1]
        xp = jnp.pad(xx, ((0, 0), (0, 0), (1, 1)))
        cols = jnp.stack([xp[:, :, k:k + T] for k in range(3)], axis=-1)   # (N,Cin,T,3)
        return jnp.einsum("nctk,ock->not", cols, W) + b[None, :, None]

    h = jax.nn.relu(conv1d(c, W1, b1))
    return jax.nn.relu(conv1d(h, W2, b2))


if __name__ == "__main__":
    # Small shapes consistent with the module: x (N, in_c, L), skip (N, out_c, 2L)
    N, in_c, out_c, L = 4, 8, 4, 16

    key = jax.random.PRNGKey(0)
    ks = jax.random.split(key, 8)
    params = {
        "Wt": 0.1 * jax.random.normal(ks[0], (in_c, out_c, 2), jnp.float32),       # ConvTranspose1d
        "bt": 0.1 * jax.random.normal(ks[1], (out_c,), jnp.float32),
        "W1": 0.1 * jax.random.normal(ks[2], (out_c, 2 * out_c, 3), jnp.float32),  # conv1
        "b1": 0.1 * jax.random.normal(ks[3], (out_c,), jnp.float32),
        "W2": 0.1 * jax.random.normal(ks[4], (out_c, out_c, 3), jnp.float32),      # conv2
        "b2": 0.1 * jax.random.normal(ks[5], (out_c,), jnp.float32),
    }
    x = jax.random.normal(ks[6], (N, in_c, L), jnp.float32)
    skip = jax.random.normal(ks[7], (N, out_c, 2 * L), jnp.float32)

    ref = jax.block_until_ready(reference(params, x, skip))

    # Exact f32 path (tight tolerance against the f32 reference).
    kp_f32 = prepare_decoder_params(params, compute_dtype=jnp.float32)
    fwd_f32 = jax.jit(lambda a, b: decoder_block_forward(kp_f32, a, b))
    out_f32 = jax.block_until_ready(fwd_f32(x, skip))
    np.testing.assert_allclose(np.asarray(out_f32), np.asarray(ref), rtol=1e-5, atol=1e-5)

    # Default bf16 MXU path (halved HBM/DMA traffic, f32 accumulation).
    kp_bf16 = prepare_decoder_params(params)           # compute_dtype=bf16
    fwd_bf16 = jax.jit(lambda a, b: decoder_block_forward(kp_bf16, a, b))
    out_bf16 = jax.block_until_ready(fwd_bf16(x, skip))
    np.testing.assert_allclose(np.asarray(out_bf16, dtype=np.float32), np.asarray(ref),
                               rtol=2e-2, atol=2e-2)

    print("KERNEL_OK")
</pallas_src>

<mosaic_0001>
module attributes {stable_mosaic.version = 11 : i64} {
  func.func @_decoder_kernel(%arg0: i32, %arg1: memref<2x8x128xf32, #tpu.memory_space<vmem>>, %arg2: memref<2x2x8x128xf32, #tpu.memory_space<vmem>>, %arg3: memref<16x8xf32, #tpu.memory_space<vmem>>, %arg4: memref<16x1xf32, #tpu.memory_space<vmem>>, %arg5: memref<8x48xf32, #tpu.memory_space<vmem>>, %arg6: memref<8x1xf32, #tpu.memory_space<vmem>>, %arg7: memref<8x24xf32, #tpu.memory_space<vmem>>, %arg8: memref<8x1xf32, #tpu.memory_space<vmem>>, %arg9: memref<2x2x8x128xf32, #tpu.memory_space<vmem>>) attributes {dimension_semantics = [#tpu.dimension_semantics<parallel>], iteration_bounds = array<i64: 2>, scalar_prefetch = 0 : i64, scratch_operands = 0 : i64, tpu.core_type = #tpu.core_type<tc>, window_params = [{transform_indices = @transform_0, window_bounds = array<i64: 2, 8, 128>}, {transform_indices = @transform_1, window_bounds = array<i64: 2, 2, 8, 128>}, {pipeline_mode = #tpu.pipeline_mode<synchronous>, transform_indices = @transform_2, window_bounds = array<i64: 16, 8>}, {pipeline_mode = #tpu.pipeline_mode<synchronous>, transform_indices = @transform_3, window_bounds = array<i64: 16, 1>}, {pipeline_mode = #tpu.pipeline_mode<synchronous>, transform_indices = @transform_4, window_bounds = array<i64: 8, 48>}, {pipeline_mode = #tpu.pipeline_mode<synchronous>, transform_indices = @transform_5, window_bounds = array<i64: 8, 1>}, {pipeline_mode = #tpu.pipeline_mode<synchronous>, transform_indices = @transform_6, window_bounds = array<i64: 8, 24>}, {pipeline_mode = #tpu.pipeline_mode<synchronous>, transform_indices = @transform_7, window_bounds = array<i64: 8, 1>}, {transform_indices = @transform_8, window_bounds = array<i64: 2, 2, 8, 128>}]} {
    %0 = tpu.iota {dimensions = array<i32: 1>} : vector<8x128xi32>
    %c16_i32 = arith.constant 16 : i32
    %1 = vector.broadcast %c16_i32 : i32 to vector<8x128xi32>
    %2 = arith.cmpi slt, %0, %1 : vector<8x128xi32>
    %c0_i32 = arith.constant 0 : i32
    %3 = vector.broadcast %c0_i32 : i32 to vector<8x128xi32>
    %4 = arith.cmpi eq, %0, %3 : vector<8x128xi32>
    %c127_i32 = arith.constant 127 : i32
    %5 = vector.broadcast %c127_i32 : i32 to vector<8x128xi32>
    %6 = arith.cmpi eq, %0, %5 : vector<8x128xi32>
    %c0 = arith.constant 0 : index
    %c0_0 = arith.constant 0 : index
    %7 = vector.load %arg3[%c0, %c0_0] : memref<16x8xf32, #tpu.memory_space<vmem>>, vector<16x8xf32>
    %c0_1 = arith.constant 0 : index
    %c0_2 = arith.constant 0 : index
    %8 = vector.load %arg5[%c0_1, %c0_2] : memref<8x48xf32, #tpu.memory_space<vmem>>, vector<8x48xf32>
    %c0_3 = arith.constant 0 : index
    %c0_4 = arith.constant 0 : index
    %9 = vector.load %arg7[%c0_3, %c0_4] : memref<8x24xf32, #tpu.memory_space<vmem>>, vector<8x24xf32>
    %c0_5 = arith.constant 0 : index
    %c0_6 = arith.constant 0 : index
    %10 = vector.load %arg4[%c0_5, %c0_6] : memref<16x1xf32, #tpu.memory_space<vmem>>, vector<16x1xf32>
    %c0_7 = arith.constant 0 : index
    %c0_8 = arith.constant 0 : index
    %11 = vector.load %arg6[%c0_7, %c0_8] : memref<8x1xf32, #tpu.memory_space<vmem>>, vector<8x1xf32>
    %c0_9 = arith.constant 0 : index
    %c0_10 = arith.constant 0 : index
    %12 = vector.load %arg8[%c0_9, %c0_10] : memref<8x1xf32, #tpu.memory_space<vmem>>, vector<8x1xf32>
    %c0_i32_11 = arith.constant 0 : i32
    %13 = arith.index_cast %c0_i32_11 : i32 to index
    %c0_12 = arith.constant 0 : index
    %c0_13 = arith.constant 0 : index
    %14 = vector.load %arg1[%13, %c0_12, %c0_13] : memref<2x8x128xf32, #tpu.memory_space<vmem>>, vector<1x8x128xf32>
    %15 = vector.shape_cast %14 : vector<1x8x128xf32> to vector<8x128xf32>
    %16 = arith.index_cast %c0_i32_11 : i32 to index
    %c0_14 = arith.constant 0 : index
    %c0_15 = arith.constant 0 : index
    %c0_16 = arith.constant 0 : index
    %17 = vector.load %arg2[%16, %c0_14, %c0_15, %c0_16] : memref<2x2x8x128xf32, #tpu.memory_space<vmem>>, vector<1x1x8x128xf32>
    %18 = vector.shape_cast %17 : vector<1x1x8x128xf32> to vector<8x128xf32>
    %19 = arith.index_cast %c0_i32_11 : i32 to index
    %c1 = arith.constant 1 : index
    %c0_17 = arith.constant 0 : index
    %c0_18 = arith.constant 0 : index
    %20 = vector.load %arg2[%19, %c1, %c0_17, %c0_18] : memref<2x2x8x128xf32, #tpu.memory_space<vmem>>, vector<1x1x8x128xf32>
    %21 = vector.shape_cast %20 : vector<1x1x8x128xf32> to vector<8x128xf32>
    %cst = arith.constant dense<0.000000e+00> : vector<16x128xf32>
    %22 = tpu.matmul %7, %15, %cst {dimension_numbers = #tpu.dot_dimension_numbers<[1], [0], [0], [1], [0, 0, 1, 1], [], []>} : vector<16x8xf32>, vector<8x128xf32>, vector<16x128xf32> -> vector<16x128xf32>
    %23 = vector.broadcast %10 : vector<16x1xf32> to vector<16x128xf32>
    %24 = arith.addf %22, %23 : vector<16x128xf32>
    %25 = vector.extract_strided_slice %24 {offsets = [0, 0], sizes = [8, 128], strides = [1, 1]} : vector<16x128xf32> to vector<8x128xf32>
    %cst_19 = arith.constant 0.000000e+00 : f32
    %26 = vector.broadcast %cst_19 : f32 to vector<8x128xf32>
    %27 = arith.select %2, %25, %26 : vector<8x128xi1>, vector<8x128xf32>
    %28 = vector.extract_strided_slice %24 {offsets = [8, 0], sizes = [8, 128], strides = [1, 1]} : vector<16x128xf32> to vector<8x128xf32>
    %cst_20 = arith.constant 0.000000e+00 : f32
    %29 = vector.broadcast %cst_20 : f32 to vector<8x128xf32>
    %30 = arith.select %2, %28, %29 : vector<8x128xi1>, vector<8x128xf32>
    %c1_i32 = arith.constant 1 : i32
    %31 = tpu.dynamic_rotate %30 by %c1_i32 dim 1 : vector<8x128xf32>, i32 -> vector<8x128xf32>
    %cst_21 = arith.constant 0.000000e+00 : f32
    %32 = vector.broadcast %cst_21 : f32 to vector<8x128xf32>
    %33 = arith.select %4, %32, %31 : vector<8x128xi1>, vector<8x128xf32>
    %c1_i32_22 = arith.constant 1 : i32
    %34 = tpu.dynamic_rotate %21 by %c1_i32_22 dim 1 : vector<8x128xf32>, i32 -> vector<8x128xf32>
    %cst_23 = arith.constant 0.000000e+00 : f32
    %35 = vector.broadcast %cst_23 : f32 to vector<8x128xf32>
    %36 = arith.select %4, %35, %34 : vector<8x128xi1>, vector<8x128xf32>
    %37 = tpu.concatenate %33, %27, %30, %36, %18, %21 in 0 : vector<8x128xf32>, vector<8x128xf32>, vector<8x128xf32>, vector<8x128xf32>, vector<8x128xf32>, vector<8x128xf32> -> vector<48x128xf32>
    %c127_i32_24 = arith.constant 127 : i32
    %38 = tpu.dynamic_rotate %27 by %c127_i32_24 dim 1 : vector<8x128xf32>, i32 -> vector<8x128xf32>
    %cst_25 = arith.constant 0.000000e+00 : f32
    %39 = vector.broadcast %cst_25 : f32 to vector<8x128xf32>
    %40 = arith.select %6, %39, %38 : vector<8x128xi1>, vector<8x128xf32>
    %c127_i32_26 = arith.constant 127 : i32
    %41 = tpu.dynamic_rotate %18 by %c127_i32_26 dim 1 : vector<8x128xf32>, i32 -> vector<8x128xf32>
    %cst_27 = arith.constant 0.000000e+00 : f32
    %42 = vector.broadcast %cst_27 : f32 to vector<8x128xf32>
    %43 = arith.select %6, %42, %41 : vector<8x128xi1>, vector<8x128xf32>
    %44 = tpu.concatenate %27, %30, %40, %18, %21, %43 in 0 : vector<8x128xf32>, vector<8x128xf32>, vector<8x128xf32>, vector<8x128xf32>, vector<8x128xf32>, vector<8x128xf32> -> vector<48x128xf32>
    %cst_28 = arith.constant dense<0.000000e+00> : vector<8x128xf32>
    %45 = tpu.matmul %8, %37, %cst_28 {dimension_numbers = #tpu.dot_dimension_numbers<[1], [0], [0], [1], [0, 0, 1, 1], [], []>} : vector<8x48xf32>, vector<48x128xf32>, vector<8x128xf32> -> vector<8x128xf32>
    %46 = vector.broadcast %11 : vector<8x1xf32> to vector<8x128xf32>
    %47 = arith.addf %45, %46 : vector<8x128xf32>
    %cst_29 = arith.constant 0.000000e+00 : f32
    %48 = vector.broadcast %cst_29 : f32 to vector<8x128xf32>
    %49 = arith.maximumf %47, %48 : vector<8x128xf32>
    %cst_30 = arith.constant 0.000000e+00 : f32
    %50 = vector.broadcast %cst_30 : f32 to vector<8x128xf32>
    %51 = arith.select %2, %49, %50 : vector<8x128xi1>, vector<8x128xf32>
    %cst_31 = arith.constant dense<0.000000e+00> : vector<8x128xf32>
    %52 = tpu.matmul %8, %44, %cst_31 {dimension_numbers = #tpu.dot_dimension_numbers<[1], [0], [0], [1], [0, 0, 1, 1], [], []>} : vector<8x48xf32>, vector<48x128xf32>, vector<8x128xf32> -> vector<8x128xf32>
    %53 = vector.broadcast %11 : vector<8x1xf32> to vector<8x128xf32>
    %54 = arith.addf %52, %53 : vector<8x128xf32>
    %cst_32 = arith.constant 0.000000e+00 : f32
    %55 = vector.broadcast %cst_32 : f32 to vector<8x128xf32>
    %56 = arith.maximumf %54, %55 : vector<8x128xf32>
    %cst_33 = arith.constant 0.000000e+00 : f32
    %57 = vector.broadcast %cst_33 : f32 to vector<8x128xf32>
    %58 = arith.select %2, %56, %57 : vector<8x128xi1>, vector<8x128xf32>
    %c1_i32_34 = arith.constant 1 : i32
    %59 = tpu.dynamic_rotate %58 by %c1_i32_34 dim 1 : vector<8x128xf32>, i32 -> vector<8x128xf32>
    %cst_35 = arith.constant 0.000000e+00 : f32
    %60 = vector.broadcast %cst_35 : f32 to vector<8x128xf32>
    %61 = arith.select %4, %60, %59 : vector<8x128xi1>, vector<8x128xf32>
    %62 = tpu.concatenate %61, %51, %58 in 0 : vector<8x128xf32>, vector<8x128xf32>, vector<8x128xf32> -> vector<24x128xf32>
    %c127_i32_36 = arith.constant 127 : i32
    %63 = tpu.dynamic_rotate %51 by %c127_i32_36 dim 1 : vector<8x128xf32>, i32 -> vector<8x128xf32>
    %cst_37 = arith.constant 0.000000e+00 : f32
    %64 = vector.broadcast %cst_37 : f32 to vector<8x128xf32>
    %65 = arith.select %6, %64, %63 : vector<8x128xi1>, vector<8x128xf32>
    %66 = tpu.concatenate %51, %58, %65 in 0 : vector<8x128xf32>, vector<8x128xf32>, vector<8x128xf32> -> vector<24x128xf32>
    %cst_38 = arith.constant dense<0.000000e+00> : vector<8x128xf32>
    %67 = tpu.matmul %9, %62, %cst_38 {dimension_numbers = #tpu.dot_dimension_numbers<[1], [0], [0], [1], [0, 0, 1, 1], [], []>} : vector<8x24xf32>, vector<24x128xf32>, vector<8x128xf32> -> vector<8x128xf32>
    %68 = vector.broadcast %12 : vector<8x1xf32> to vector<8x128xf32>
    %69 = arith.addf %67, %68 : vector<8x128xf32>
    %cst_39 = arith.constant 0.000000e+00 : f32
    %70 = vector.broadcast %cst_39 : f32 to vector<8x128xf32>
    %71 = arith.maximumf %69, %70 : vector<8x128xf32>
    %cst_40 = arith.constant 0.000000e+00 : f32
    %72 = vector.broadcast %cst_40 : f32 to vector<8x128xf32>
    %73 = arith.select %2, %71, %72 : vector<8x128xi1>, vector<8x128xf32>
    %cst_41 = arith.constant dense<0.000000e+00> : vector<8x128xf32>
    %74 = tpu.matmul %9, %66, %cst_41 {dimension_numbers = #tpu.dot_dimension_numbers<[1], [0], [0], [1], [0, 0, 1, 1], [], []>} : vector<8x24xf32>, vector<24x128xf32>, vector<8x128xf32> -> vector<8x128xf32>
    %75 = vector.broadcast %12 : vector<8x1xf32> to vector<8x128xf32>
    %76 = arith.addf %74, %75 : vector<8x128xf32>
    %cst_42 = arith.constant 0.000000e+00 : f32
    %77 = vector.broadcast %cst_42 : f32 to vector<8x128xf32>
    %78 = arith.maximumf %76, %77 : vector<8x128xf32>
    %cst_43 = arith.constant 0.000000e+00 : f32
    %79 = vector.broadcast %cst_43 : f32 to vector<8x128xf32>
    %80 = arith.select %2, %78, %79 : vector<8x128xi1>, vector<8x128xf32>
    %81 = arith.index_cast %c0_i32_11 : i32 to index
    %c0_44 = arith.constant 0 : index
    %c0_45 = arith.constant 0 : index
    %c0_46 = arith.constant 0 : index
    %82 = vector.load %arg9[%81, %c0_44, %c0_45, %c0_46] : memref<2x2x8x128xf32, #tpu.memory_space<vmem>>, vector<1x1x8x128xf32>
    %83 = vector.shape_cast %82 : vector<1x1x8x128xf32> to vector<8x128xf32>
    %84 = vector.shape_cast %73 : vector<8x128xf32> to vector<1x1x8x128xf32>
    tpu.vector_store %arg9[%81, %c0_44, %c0_45, %c0_46], %84 {strides = array<i32>} : memref<2x2x8x128xf32, #tpu.memory_space<vmem>>, vector<1x1x8x128xf32>,
    %85 = arith.index_cast %c0_i32_11 : i32 to index
    %c1_47 = arith.constant 1 : index
    %c0_48 = arith.constant 0 : index
    %c0_49 = arith.constant 0 : index
    %86 = vector.load %arg9[%85, %c1_47, %c0_48, %c0_49] : memref<2x2x8x128xf32, #tpu.memory_space<vmem>>, vector<1x1x8x128xf32>
    %87 = vector.shape_cast %86 : vector<1x1x8x128xf32> to vector<8x128xf32>
    %88 = vector.shape_cast %80 : vector<8x128xf32> to vector<1x1x8x128xf32>
    tpu.vector_store %arg9[%85, %c1_47, %c0_48, %c0_49], %88 {strides = array<i32>} : memref<2x2x8x128xf32, #tpu.memory_space<vmem>>, vector<1x1x8x128xf32>,
    %c1_i32_50 = arith.constant 1 : i32
    %89 = arith.index_cast %c1_i32_50 : i32 to index
    %c0_51 = arith.constant 0 : index
    %c0_52 = arith.constant 0 : index
    %90 = vector.load %arg1[%89, %c0_51, %c0_52] : memref<2x8x128xf32, #tpu.memory_space<vmem>>, vector<1x8x128xf32>
    %91 = vector.shape_cast %90 : vector<1x8x128xf32> to vector<8x128xf32>
    %92 = arith.index_cast %c1_i32_50 : i32 to index
    %c0_53 = arith.constant 0 : index
    %c0_54 = arith.constant 0 : index
    %c0_55 = arith.constant 0 : index
    %93 = vector.load %arg2[%92, %c0_53, %c0_54, %c0_55] : memref<2x2x8x128xf32, #tpu.memory_space<vmem>>, vector<1x1x8x128xf32>
    %94 = vector.shape_cast %93 : vector<1x1x8x128xf32> to vector<8x128xf32>
    %95 = arith.index_cast %c1_i32_50 : i32 to index
    %c1_56 = arith.constant 1 : index
    %c0_57 = arith.constant 0 : index
    %c0_58 = arith.constant 0 : index
    %96 = vector.load %arg2[%95, %c1_56, %c0_57, %c0_58] : memref<2x2x8x128xf32, #tpu.memory_space<vmem>>, vector<1x1x8x128xf32>
    %97 = vector.shape_cast %96 : vector<1x1x8x128xf32> to vector<8x128xf32>
    %cst_59 = arith.constant dense<0.000000e+00> : vector<16x128xf32>
    %98 = tpu.matmul %7, %91, %cst_59 {dimension_numbers = #tpu.dot_dimension_numbers<[1], [0], [0], [1], [0, 0, 1, 1], [], []>} : vector<16x8xf32>, vector<8x128xf32>, vector<16x128xf32> -> vector<16x128xf32>
    %99 = vector.broadcast %10 : vector<16x1xf32> to vector<16x128xf32>
    %100 = arith.addf %98, %99 : vector<16x128xf32>
    %101 = vector.extract_strided_slice %100 {offsets = [0, 0], sizes = [8, 128], strides = [1, 1]} : vector<16x128xf32> to vector<8x128xf32>
    %cst_60 = arith.constant 0.000000e+00 : f32
    %102 = vector.broadcast %cst_60 : f32 to vector<8x128xf32>
    %103 = arith.select %2, %101, %102 : vector<8x128xi1>, vector<8x128xf32>
    %104 = vector.extract_strided_slice %100 {offsets = [8, 0], sizes = [8, 128], strides = [1, 1]} : vector<16x128xf32> to vector<8x128xf32>
    %cst_61 = arith.constant 0.000000e+00 : f32
    %105 = vector.broadcast %cst_61 : f32 to vector<8x128xf32>
    %106 = arith.select %2, %104, %105 : vector<8x128xi1>, vector<8x128xf32>
    %c1_i32_62 = arith.constant 1 : i32
    %107 = tpu.dynamic_rotate %106 by %c1_i32_62 dim 1 : vector<8x128xf32>, i32 -> vector<8x128xf32>
    %cst_63 = arith.constant 0.000000e+00 : f32
    %108 = vector.broadcast %cst_63 : f32 to vector<8x128xf32>
    %109 = arith.select %4, %108, %107 : vector<8x128xi1>, vector<8x128xf32>
    %c1_i32_64 = arith.constant 1 : i32
    %110 = tpu.dynamic_rotate %97 by %c1_i32_64 dim 1 : vector<8x128xf32>, i32 -> vector<8x128xf32>
    %cst_65 = arith.constant 0.000000e+00 : f32
    %111 = vector.broadcast %cst_65 : f32 to vector<8x128xf32>
    %112 = arith.select %4, %111, %110 : vector<8x128xi1>, vector<8x128xf32>
    %113 = tpu.concatenate %109, %103, %106, %112, %94, %97 in 0 : vector<8x128xf32>, vector<8x128xf32>, vector<8x128xf32>, vector<8x128xf32>, vector<8x128xf32>, vector<8x128xf32> -> vector<48x128xf32>
    %c127_i32_66 = arith.constant 127 : i32
    %114 = tpu.dynamic_rotate %103 by %c127_i32_66 dim 1 : vector<8x128xf32>, i32 -> vector<8x128xf32>
    %cst_67 = arith.constant 0.000000e+00 : f32
    %115 = vector.broadcast %cst_67 : f32 to vector<8x128xf32>
    %116 = arith.select %6, %115, %114 : vector<8x128xi1>, vector<8x128xf32>
    %c127_i32_68 = arith.constant 127 : i32
    %117 = tpu.dynamic_rotate %94 by %c127_i32_68 dim 1 : vector<8x128xf32>, i32 -> vector<8x128xf32>
    %cst_69 = arith.constant 0.000000e+00 : f32
    %118 = vector.broadcast %cst_69 : f32 to vector<8x128xf32>
    %119 = arith.select %6, %118, %117 : vector<8x128xi1>, vector<8x128xf32>
    %120 = tpu.concatenate %103, %106, %116, %94, %97, %119 in 0 : vector<8x128xf32>, vector<8x128xf32>, vector<8x128xf32>, vector<8x128xf32>, vector<8x128xf32>, vector<8x128xf32> -> vector<48x128xf32>
    %cst_70 = arith.constant dense<0.000000e+00> : vector<8x128xf32>
    %121 = tpu.matmul %8, %113, %cst_70 {dimension_numbers = #tpu.dot_dimension_numbers<[1], [0], [0], [1], [0, 0, 1, 1], [], []>} : vector<8x48xf32>, vector<48x128xf32>, vector<8x128xf32> -> vector<8x128xf32>
    %122 = vector.broadcast %11 : vector<8x1xf32> to vector<8x128xf32>
    %123 = arith.addf %121, %122 : vector<8x128xf32>
    %cst_71 = arith.constant 0.000000e+00 : f32
    %124 = vector.broadcast %cst_71 : f32 to vector<8x128xf32>
    %125 = arith.maximumf %123, %124 : vector<8x128xf32>
    %cst_72 = arith.constant 0.000000e+00 : f32
    %126 = vector.broadcast %cst_72 : f32 to vector<8x128xf32>
    %127 = arith.select %2, %125, %126 : vector<8x128xi1>, vector<8x128xf32>
    %cst_73 = arith.constant dense<0.000000e+00> : vector<8x128xf32>
    %128 = tpu.matmul %8, %120, %cst_73 {dimension_numbers = #tpu.dot_dimension_numbers<[1], [0], [0], [1], [0, 0, 1, 1], [], []>} : vector<8x48xf32>, vector<48x128xf32>, vector<8x128xf32> -> vector<8x128xf32>
    %129 = vector.broadcast %11 : vector<8x1xf32> to vector<8x128xf32>
    %130 = arith.addf %128, %129 : vector<8x128xf32>
    %cst_74 = arith.constant 0.000000e+00 : f32
    %131 = vector.broadcast %cst_74 : f32 to vector<8x128xf32>
    %132 = arith.maximumf %130, %131 : vector<8x128xf32>
    %cst_75 = arith.constant 0.000000e+00 : f32
    %133 = vector.broadcast %cst_75 : f32 to vector<8x128xf32>
    %134 = arith.select %2, %132, %133 : vector<8x128xi1>, vector<8x128xf32>
    %c1_i32_76 = arith.constant 1 : i32
    %135 = tpu.dynamic_rotate %134 by %c1_i32_76 dim 1 : vector<8x128xf32>, i32 -> vector<8x128xf32>
    %cst_77 = arith.constant 0.000000e+00 : f32
    %136 = vector.broadcast %cst_77 : f32 to vector<8x128xf32>
    %137 = arith.select %4, %136, %135 : vector<8x128xi1>, vector<8x128xf32>
    %138 = tpu.concatenate %137, %127, %134 in 0 : vector<8x128xf32>, vector<8x128xf32>, vector<8x128xf32> -> vector<24x128xf32>
    %c127_i32_78 = arith.constant 127 : i32
    %139 = tpu.dynamic_rotate %127 by %c127_i32_78 dim 1 : vector<8x128xf32>, i32 -> vector<8x128xf32>
    %cst_79 = arith.constant 0.000000e+00 : f32
    %140 = vector.broadcast %cst_79 : f32 to vector<8x128xf32>
    %141 = arith.select %6, %140, %139 : vector<8x128xi1>, vector<8x128xf32>
    %142 = tpu.concatenate %127, %134, %141 in 0 : vector<8x128xf32>, vector<8x128xf32>, vector<8x128xf32> -> vector<24x128xf32>
    %cst_80 = arith.constant dense<0.000000e+00> : vector<8x128xf32>
    %143 = tpu.matmul %9, %138, %cst_80 {dimension_numbers = #tpu.dot_dimension_numbers<[1], [0], [0], [1], [0, 0, 1, 1], [], []>} : vector<8x24xf32>, vector<24x128xf32>, vector<8x128xf32> -> vector<8x128xf32>
    %144 = vector.broadcast %12 : vector<8x1xf32> to vector<8x128xf32>
    %145 = arith.addf %143, %144 : vector<8x128xf32>
    %cst_81 = arith.constant 0.000000e+00 : f32
    %146 = vector.broadcast %cst_81 : f32 to vector<8x128xf32>
    %147 = arith.maximumf %145, %146 : vector<8x128xf32>
    %cst_82 = arith.constant 0.000000e+00 : f32
    %148 = vector.broadcast %cst_82 : f32 to vector<8x128xf32>
    %149 = arith.select %2, %147, %148 : vector<8x128xi1>, vector<8x128xf32>
    %cst_83 = arith.constant dense<0.000000e+00> : vector<8x128xf32>
    %150 = tpu.matmul %9, %142, %cst_83 {dimension_numbers = #tpu.dot_dimension_numbers<[1], [0], [0], [1], [0, 0, 1, 1], [], []>} : vector<8x24xf32>, vector<24x128xf32>, vector<8x128xf32> -> vector<8x128xf32>
    %151 = vector.broadcast %12 : vector<8x1xf32> to vector<8x128xf32>
    %152 = arith.addf %150, %151 : vector<8x128xf32>
    %cst_84 = arith.constant 0.000000e+00 : f32
    %153 = vector.broadcast %cst_84 : f32 to vector<8x128xf32>
    %154 = arith.maximumf %152, %153 : vector<8x128xf32>
    %cst_85 = arith.constant 0.000000e+00 : f32
    %155 = vector.broadcast %cst_85 : f32 to vector<8x128xf32>
    %156 = arith.select %2, %154, %155 : vector<8x128xi1>, vector<8x128xf32>
    %157 = arith.index_cast %c1_i32_50 : i32 to index
    %c0_86 = arith.constant 0 : index
    %c0_87 = arith.constant 0 : index
    %c0_88 = arith.constant 0 : index
    %158 = vector.load %arg9[%157, %c0_86, %c0_87, %c0_88] : memref<2x2x8x128xf32, #tpu.memory_space<vmem>>, vector<1x1x8x128xf32>
    %159 = vector.shape_cast %158 : vector<1x1x8x128xf32> to vector<8x128xf32>
    %160 = vector.shape_cast %149 : vector<8x128xf32> to vector<1x1x8x128xf32>
    tpu.vector_store %arg9[%157, %c0_86, %c0_87, %c0_88], %160 {strides = array<i32>} : memref<2x2x8x128xf32, #tpu.memory_space<vmem>>, vector<1x1x8x128xf32>,
    %161 = arith.index_cast %c1_i32_50 : i32 to index
    %c1_89 = arith.constant 1 : index
    %c0_90 = arith.constant 0 : index
    %c0_91 = arith.constant 0 : index
    %162 = vector.load %arg9[%161, %c1_89, %c0_90, %c0_91] : memref<2x2x8x128xf32, #tpu.memory_space<vmem>>, vector<1x1x8x128xf32>
    %163 = vector.shape_cast %162 : vector<1x1x8x128xf32> to vector<8x128xf32>
    %164 = vector.shape_cast %156 : vector<8x128xf32> to vector<1x1x8x128xf32>
    tpu.vector_store %arg9[%161, %c1_89, %c0_90, %c0_91], %164 {strides = array<i32>} : memref<2x2x8x128xf32, #tpu.memory_space<vmem>>, vector<1x1x8x128xf32>,
    %c2_i32 = arith.constant 2 : i32
    return
  }
  func.func @transform_0(%arg0: i32) -> (i32, i32, i32) {
    %c0_i32 = arith.constant 0 : i32
    %c0_i32_0 = arith.constant 0 : i32
    %c0_i32_1 = arith.constant 0 : i32
    return %arg0, %c0_i32, %c0_i32_0 : i32, i32, i32
  }
  func.func @transform_1(%arg0: i32) -> (i32, i32, i32, i32) {
    %c0_i32 = arith.constant 0 : i32
    %c0_i32_0 = arith.constant 0 : i32
    %c0_i32_1 = arith.constant 0 : i32
    %c0_i32_2 = arith.constant 0 : i32
    return %arg0, %c0_i32, %c0_i32_0, %c0_i32_1 : i32, i32, i32, i32
  }
  func.func @transform_2(%arg0: i32) -> (i32, i32) {
    %c0_i32 = arith.constant 0 : i32
    %c0_i32_0 = arith.constant 0 : i32
    %c0_i32_1 = arith.constant 0 : i32
    return %c0_i32, %c0_i32_0 : i32, i32
  }
  func.func @transform_3(%arg0: i32) -> (i32, i32) {
    %c0_i32 = arith.constant 0 : i32
    %c0_i32_0 = arith.constant 0 : i32
    %c0_i32_1 = arith.constant 0 : i32
    return %c0_i32, %c0_i32_0 : i32, i32
  }
  func.func @transform_4(%arg0: i32) -> (i32, i32) {
    %c0_i32 = arith.constant 0 : i32
    %c0_i32_0 = arith.constant 0 : i32
    %c0_i32_1 = arith.constant 0 : i32
    return %c0_i32, %c0_i32_0 : i32, i32
  }
  func.func @transform_5(%arg0: i32) -> (i32, i32) {
    %c0_i32 = arith.constant 0 : i32
    %c0_i32_0 = arith.constant 0 : i32
    %c0_i32_1 = arith.constant 0 : i32
    return %c0_i32, %c0_i32_0 : i32, i32
  }
  func.func @transform_6(%arg0: i32) -> (i32, i32) {
    %c0_i32 = arith.constant 0 : i32
    %c0_i32_0 = arith.constant 0 : i32
    %c0_i32_1 = arith.constant 0 : i32
    return %c0_i32, %c0_i32_0 : i32, i32
  }
  func.func @transform_7(%arg0: i32) -> (i32, i32) {
    %c0_i32 = arith.constant 0 : i32
    %c0_i32_0 = arith.constant 0 : i32
    %c0_i32_1 = arith.constant 0 : i32
    return %c0_i32, %c0_i32_0 : i32, i32
  }
  func.func @transform_8(%arg0: i32) -> (i32, i32, i32, i32) {
    %c0_i32 = arith.constant 0 : i32
    %c0_i32_0 = arith.constant 0 : i32
    %c0_i32_1 = arith.constant 0 : i32
    %c0_i32_2 = arith.constant 0 : i32
    return %arg0, %c0_i32, %c0_i32_0, %c0_i32_1 : i32, i32, i32, i32
  }
}

</mosaic_0001>

<llo_original>
// kernel: _lambda_.1
$region0: #{_lambda_.1}
  #allocation0 [shape = 'u32[]', space=smem, size = 0x4, offset = 0x4, fixed_abs, tag = 'smem constant byte address 0x4 - core index']
  #allocation1 [shape = 'u32[144,128]{1,0:T(1,128)}', space=vmem, size = 0x12000, scoped, tag = 'internal scratch']
  %s0 = inlined_call_operand.vmem [shape: f32[4,8,128], index: 0, kind: input, shape index: {}]
  %s1 = inlined_call_operand.vmem [shape: f32[4,2,8,128], index: 1, kind: input, shape index: {}]
  %s2 = inlined_call_operand.vmem [shape: f32[16,8], index: 2, kind: input, shape index: {}]
  %s3 = inlined_call_operand.vmem [shape: f32[16,1], index: 3, kind: input, shape index: {}]
  %s4 = inlined_call_operand.vmem [shape: f32[8,48], index: 4, kind: input, shape index: {}]
  %s5 = inlined_call_operand.vmem [shape: f32[8,1], index: 5, kind: input, shape index: {}]
  %s6 = inlined_call_operand.vmem [shape: f32[8,24], index: 6, kind: input, shape index: {}]
  %s7 = inlined_call_operand.vmem [shape: f32[8,1], index: 7, kind: input, shape index: {}]
  %s8 = inlined_call_operand.vmem [shape: f32[4,2,8,128], index: 8, kind: output, shape index: {}]
  %s9 = sld [smem:[#allocation0]]
  $region65: #{_lambda_.1} parent=0
    _
  %s11 = ssub.s32 1, %s9
  %s12 = scalar_select 0, %s11, %s9
  loop: start=0, step=1, limit=4
  $region2: #{_lambda_.1} parent=0 // loop_pre_header
    _
  $region3: #{_lambda_.1} parent=0 // loop_header
    %s14 = sphi 0, %s18
    %p15 = scmp.ge.s32.totalorder %s14, 4
    %s24 = sphi 0, %s26
    %s27 = sphi 0, %s24
    %s28 = sphi 0, %s27
    %s44 = sphi 0, %s28
    %s50 = sphi 0, %s52
    %s53 = sphi 0, %s50
    %s54 = sphi 0, %s53
    %s70 = sphi 0, %s54
    %s74 = sphi 0, %s74
    %s76 = sphi 0, %s74
    %s77 = sphi 0, %s76
    %s91 = sphi 0, %s77
    %s95 = sphi 0, %s95
    %s97 = sphi 0, %s95
    %s98 = sphi 0, %s97
    %s112 = sphi 0, %s98
    %s116 = sphi 0, %s116
    %s118 = sphi 0, %s116
    %s119 = sphi 0, %s118
    %s133 = sphi 0, %s119
    %s137 = sphi 0, %s137
    %s139 = sphi 0, %s137
    %s140 = sphi 0, %s139
    %s154 = sphi 0, %s140
    %s158 = sphi 0, %s158
    %s160 = sphi 0, %s158
    %s161 = sphi 0, %s160
    %s175 = sphi 0, %s161
    %s179 = sphi 0, %s179
    %s181 = sphi 0, %s179
    %s182 = sphi 0, %s181
    %s196 = sphi 0, %s182
    %s202 = sphi 0, %s204
    %s205 = sphi 0, %s202
    %s206 = sphi 0, %s205
    %s222 = sphi 0, %s206
  $region4: #{_lambda_.1} parent=0 // loop_header_branch
    %17 = sbr.rel (%p15) target = $region8
  $region5: #{_lambda_.1} parent=0 // loop_body
    %s19 = ssub.s32 %s14, 1
    %s20 = ssub.s32 %s14, 2
    %s21 = sadd.s32 %s14, 1
    %s22 = ssub.s32 %s14, %s21
    %p23 = scmp.eq.s32.totalorder %s22, 0
    %s25 = sadd.s32 %s24, 1
    %s26 = scalar_select %p23, %s24, %s25
    %p29 = pneg %p23
    %p30 = scmp.eq.s32.totalorder %s14, 1
    %p31 = por %p29, %p30
    %p32 = scmp.ne.s32.totalorder %s24, %s27
    %p33 = scmp.eq.s32.totalorder %s14, 0
    %p34 = por %p32, %p33
    %p35 = scmp.ne.s32.totalorder %s24, %s27
    %p36 = scmp.eq.s32.totalorder %s19, 1
    %p37 = por %p35, %p36
    %p38 = scmp.ne.s32.totalorder %s27, %s28
    %p39 = scmp.eq.s32.totalorder %s19, 0
    %p40 = por %p38, %p39
    %p41 = scmp.ne.s32.totalorder %s27, %s28
    %p42 = scmp.eq.s32.totalorder %s20, 1
    %p43 = por %p41, %p42
    %p45 = scmp.ne.s32.totalorder %s28, %s44
    %p46 = scmp.eq.s32.totalorder %s20, 0
    %p47 = por %p45, %p46
    %s48 = ssub.s32 %s14, %s21
    %p49 = scmp.eq.s32.totalorder %s48, 0
    %s51 = sadd.s32 %s50, 1
    %s52 = scalar_select %p49, %s50, %s51
    %p55 = pneg %p49
    %p56 = scmp.eq.s32.totalorder %s14, 1
    %p57 = por %p55, %p56
    %p58 = scmp.ne.s32.totalorder %s50, %s53
    %p59 = scmp.eq.s32.totalorder %s14, 0
    %p60 = por %p58, %p59
    %p61 = scmp.ne.s32.totalorder %s50, %s53
    %p62 = scmp.eq.s32.totalorder %s19, 1
    %p63 = por %p61, %p62
    %p64 = scmp.ne.s32.totalorder %s53, %s54
    %p65 = scmp.eq.s32.totalorder %s19, 0
    %p66 = por %p64, %p65
    %p67 = scmp.ne.s32.totalorder %s53, %s54
    %p68 = scmp.eq.s32.totalorder %s20, 1
    %p69 = por %p67, %p68
    %p71 = scmp.ne.s32.totalorder %s54, %s70
    %p72 = scmp.eq.s32.totalorder %s20, 0
    %p73 = por %p71, %p72
    %s75 = sadd.s32 %s74, 1
    %p78 = scmp.eq.s32.totalorder %s14, 1
    %p79 = scmp.ne.s32.totalorder %s74, %s76
    %p80 = scmp.eq.s32.totalorder %s14, 0
    %p81 = por %p79, %p80
    %p82 = scmp.ne.s32.totalorder %s74, %s76
    %p83 = scmp.eq.s32.totalorder %s19, 1
    %p84 = por %p82, %p83
    %p85 = scmp.ne.s32.totalorder %s76, %s77
    %p86 = scmp.eq.s32.totalorder %s19, 0
    %p87 = por %p85, %p86
    %p88 = scmp.ne.s32.totalorder %s76, %s77
    %p89 = scmp.eq.s32.totalorder %s20, 1
    %p90 = por %p88, %p89
    %p92 = scmp.ne.s32.totalorder %s77, %s91
    %p93 = scmp.eq.s32.totalorder %s20, 0
    %p94 = por %p92, %p93
    %s96 = sadd.s32 %s95, 1
    %p99 = scmp.eq.s32.totalorder %s14, 1
    %p100 = scmp.ne.s32.totalorder %s95, %s97
    %p101 = scmp.eq.s32.totalorder %s14, 0
    %p102 = por %p100, %p101
    %p103 = scmp.ne.s32.totalorder %s95, %s97
    %p104 = scmp.eq.s32.totalorder %s19, 1
    %p105 = por %p103, %p104
    %p106 = scmp.ne.s32.totalorder %s97, %s98
    %p107 = scmp.eq.s32.totalorder %s19, 0
    %p108 = por %p106, %p107
    %p109 = scmp.ne.s32.totalorder %s97, %s98
    %p110 = scmp.eq.s32.totalorder %s20, 1
    %p111 = por %p109, %p110
    %p113 = scmp.ne.s32.totalorder %s98, %s112
    %p114 = scmp.eq.s32.totalorder %s20, 0
    %p115 = por %p113, %p114
    %s117 = sadd.s32 %s116, 1
    %p120 = scmp.eq.s32.totalorder %s14, 1
    %p121 = scmp.ne.s32.totalorder %s116, %s118
    %p122 = scmp.eq.s32.totalorder %s14, 0
    %p123 = por %p121, %p122
    %p124 = scmp.ne.s32.totalorder %s116, %s118
    %p125 = scmp.eq.s32.totalorder %s19, 1
    %p126 = por %p124, %p125
    %p127 = scmp.ne.s32.totalorder %s118, %s119
    %p128 = scmp.eq.s32.totalorder %s19, 0
    %p129 = por %p127, %p128
    %p130 = scmp.ne.s32.totalorder %s118, %s119
    %p131 = scmp.eq.s32.totalorder %s20, 1
    %p132 = por %p130, %p131
    %p134 = scmp.ne.s32.totalorder %s119, %s133
    %p135 = scmp.eq.s32.totalorder %s20, 0
    %p136 = por %p134, %p135
    %s138 = sadd.s32 %s137, 1
    %p141 = scmp.eq.s32.totalorder %s14, 1
    %p142 = scmp.ne.s32.totalorder %s137, %s139
    %p143 = scmp.eq.s32.totalorder %s14, 0
    %p144 = por %p142, %p143
    %p145 = scmp.ne.s32.totalorder %s137, %s139
    %p146 = scmp.eq.s32.totalorder %s19, 1
    %p147 = por %p145, %p146
    %p148 = scmp.ne.s32.totalorder %s139, %s140
    %p149 = scmp.eq.s32.totalorder %s19, 0
    %p150 = por %p148, %p149
    %p151 = scmp.ne.s32.totalorder %s139, %s140
    %p152 = scmp.eq.s32.totalorder %s20, 1
    %p153 = por %p151, %p152
    %p155 = scmp.ne.s32.totalorder %s140, %s154
    %p156 = scmp.eq.s32.totalorder %s20, 0
    %p157 = por %p155, %p156
    %s159 = sadd.s32 %s158, 1
    %p162 = scmp.eq.s32.totalorder %s14, 1
    %p163 = scmp.ne.s32.totalorder %s158, %s160
    %p164 = scmp.eq.s32.totalorder %s14, 0
    %p165 = por %p163, %p164
    %p166 = scmp.ne.s32.totalorder %s158, %s160
    %p167 = scmp.eq.s32.totalorder %s19, 1
    %p168 = por %p166, %p167
    %p169 = scmp.ne.s32.totalorder %s160, %s161
    %p170 = scmp.eq.s32.totalorder %s19, 0
    %p171 = por %p169, %p170
    %p172 = scmp.ne.s32.totalorder %s160, %s161
    %p173 = scmp.eq.s32.totalorder %s20, 1
    %p174 = por %p172, %p173
    %p176 = scmp.ne.s32.totalorder %s161, %s175
    %p177 = scmp.eq.s32.totalorder %s20, 0
    %p178 = por %p176, %p177
    %s180 = sadd.s32 %s179, 1
    %p183 = scmp.eq.s32.totalorder %s14, 1
    %p184 = scmp.ne.s32.totalorder %s179, %s181
    %p185 = scmp.eq.s32.totalorder %s14, 0
    %p186 = por %p184, %p185
    %p187 = scmp.ne.s32.totalorder %s179, %s181
    %p188 = scmp.eq.s32.totalorder %s19, 1
    %p189 = por %p187, %p188
    %p190 = scmp.ne.s32.totalorder %s181, %s182
    %p191 = scmp.eq.s32.totalorder %s19, 0
    %p192 = por %p190, %p191
    %p193 = scmp.ne.s32.totalorder %s181, %s182
    %p194 = scmp.eq.s32.totalorder %s20, 1
    %p195 = por %p193, %p194
    %p197 = scmp.ne.s32.totalorder %s182, %s196
    %p198 = scmp.eq.s32.totalorder %s20, 0
    %p199 = por %p197, %p198
    %s200 = ssub.s32 %s14, %s21
    %p201 = scmp.eq.s32.totalorder %s200, 0
    %s203 = sadd.s32 %s202, 1
    %s204 = scalar_select %p201, %s202, %s203
    %p207 = pneg %p201
    %p208 = scmp.eq.s32.totalorder %s14, 1
    %p209 = por %p207, %p208
    %p210 = scmp.ne.s32.totalorder %s202, %s205
    %p211 = scmp.eq.s32.totalorder %s14, 0
    %p212 = por %p210, %p211
    %p213 = scmp.ne.s32.totalorder %s202, %s205
    %p214 = scmp.eq.s32.totalorder %s19, 1
    %p215 = por %p213, %p214
    %p216 = scmp.ne.s32.totalorder %s205, %s206
    %p217 = scmp.eq.s32.totalorder %s19, 0
    %p218 = por %p216, %p217
    %p219 = scmp.ne.s32.totalorder %s205, %s206
    %p220 = scmp.eq.s32.totalorder %s20, 1
    %p221 = por %p219, %p220
    %p223 = scmp.ne.s32.totalorder %s206, %s222
    %p224 = scmp.eq.s32.totalorder %s20, 0
    %p225 = por %p223, %p224
    %p226 = scmp.le.s32.totalorder 1, %s14
    %p227 = scmp.lt.s32.totalorder %s14, 3
    %p228 = pnand %p226, %p227
    %p229 = pneg %p228
    // Predicated region
    $region9: #{_lambda_.1} parent=5 // pred_check
      _
    $region10: #{_lambda_.1} parent=5 // pred_check_branch
      %231 = sbr.rel (%p228) target = $region12
    $region11: #{_lambda_.1} parent=5 // pred_region
      %s232 = ssub.s32 %s14, 1
      // Predicated region
      $region13: #{_lambda_.1} parent=11 // pred_check
        %p233 = pneg %p87
      $region14: #{_lambda_.1} parent=11 // pred_check_branch
        %235 = sbr.rel (%p233) target = $region16
      $region15: #{_lambda_.1} parent=11 // pred_region
        _
      $region16: #{_lambda_.1} parent=11 // pred_fallthru
        _
      // Predicated region
      $region17: #{_lambda_.1} parent=11 // pred_check
        %p236 = pneg %p108
      $region18: #{_lambda_.1} parent=11 // pred_check_branch
        %238 = sbr.rel (%p236) target = $region20
      $region19: #{_lambda_.1} parent=11 // pred_region
        _
      $region20: #{_lambda_.1} parent=11 // pred_fallthru
        _
      // Predicated region
      $region21: #{_lambda_.1} parent=11 // pred_check
        %p239 = pneg %p129
      $region22: #{_lambda_.1} parent=11 // pred_check_branch
        %241 = sbr.rel (%p239) target = $region24
      $region23: #{_lambda_.1} parent=11 // pred_region
        _
      $region24: #{_lambda_.1} parent=11 // pred_fallthru
        _
      // Predicated region
      $region25: #{_lambda_.1} parent=11 // pred_check
        %p242 = pneg %p150
      $region26: #{_lambda_.1} parent=11 // pred_check_branch
        %244 = sbr.rel (%p242) target = $region28
      $region27: #{_lambda_.1} parent=11 // pred_region
        _
      $region28: #{_lambda_.1} parent=11 // pred_fallthru
        _
      // Predicated region
      $region29: #{_lambda_.1} parent=11 // pred_check
        %p245 = pneg %p171
      $region30: #{_lambda_.1} parent=11 // pred_check_branch
        %247 = sbr.rel (%p245) target = $region32
      $region31: #{_lambda_.1} parent=11 // pred_region
        _
      $region32: #{_lambda_.1} parent=11 // pred_fallthru
        _
      // Predicated region
      $region33: #{_lambda_.1} parent=11 // pred_check
        %p248 = pneg %p192
      $region34: #{_lambda_.1} parent=11 // pred_check_branch
        %250 = sbr.rel (%p248) target = $region36
      $region35: #{_lambda_.1} parent=11 // pred_region
        _
      $region36: #{_lambda_.1} parent=11 // pred_fallthru
        _
    $region12: #{_lambda_.1} parent=5 // pred_fallthru
      _
    %p251 = scmp.lt.s32.totalorder %s14, 2
    // Predicated region
    $region37: #{_lambda_.1} parent=5 // pred_check
      %p252 = pneg %p251
    $region38: #{_lambda_.1} parent=5 // pred_check_branch
      %254 = sbr.rel (%p252) target = $region40
    $region39: #{_lambda_.1} parent=5 // pred_region
      // Predicated region
      $region41: #{_lambda_.1} parent=39 // pred_check
        %p255 = pneg %p34
      $region42: #{_lambda_.1} parent=39 // pred_check_branch
        %257 = sbr.rel (%p255) target = $region44
      $region43: #{_lambda_.1} parent=39 // pred_region
        %s258 = smul.u32 2, %s14
        %p259 = scmp.lt.s32.totalorder %s258, 3
        %s260 = scalar_select %p259, %s258, 3
        %s261 = smul.addr %s260, 8
        %s262 = scalar_lea.vmem %s0, %s261
        %s263 = smul.u32 2, %s14
      $region44: #{_lambda_.1} parent=39 // pred_fallthru
        _
      // Predicated region
      $region45: #{_lambda_.1} parent=39 // pred_check
        %p264 = pneg %p60
      $region46: #{_lambda_.1} parent=39 // pred_check_branch
        %266 = sbr.rel (%p264) target = $region48
      $region47: #{_lambda_.1} parent=39 // pred_region
        %s267 = smul.u32 2, %s14
        %p268 = scmp.lt.s32.totalorder %s267, 3
        %s269 = scalar_select %p268, %s267, 3
        %s270 = smul.addr %s269, 2
        %s271 = smul.addr %s270, 8
        %s272 = scalar_lea.vmem %s1, %s271
        %s273 = smul.u32 2, %s14
      $region48: #{_lambda_.1} parent=39 // pred_fallthru
        _
    $region40: #{_lambda_.1} parent=5 // pred_fallthru
      _
    %p274 = scmp.le.s32.totalorder 1, %s14
    %p275 = scmp.lt.s32.totalorder %s14, 3
    %p276 = pnand %p274, %p275
    %p277 = pneg %p276
    // Predicated region
    $region49: #{_lambda_.1} parent=5 // pred_check
      _
    $region50: #{_lambda_.1} parent=5 // pred_check_branch
      %279 = sbr.rel (%p276) target = $region52
    $region51: #{_lambda_.1} parent=5 // pred_region
      %s280 = ssub.s32 %s14, 1
      %s281 = smul.u32 2, %s19
      %p282 = scmp.lt.s32.totalorder %s281, 3
      %s283 = scalar_select %p282, %s281, 3
      %s284 = smul.addr %s283, 8
      %s285 = scalar_lea.vmem %s0, %s284
      %p286 = pneg %p40
      %p287 = pneg %p37
      %s288 = smul.u32 2, %s19
      %p289 = scmp.lt.s32.totalorder %s288, 3
      %s290 = scalar_select %p289, %s288, 3
      %s291 = smul.addr %s290, 2
      %s292 = smul.addr %s291, 8
      %s293 = scalar_lea.vmem %s1, %s292
      %p294 = pneg %p66
      %p295 = pneg %p63
      %p296 = pneg %p87
      %p297 = pneg %p84
      %p298 = pneg %p108
      %p299 = pneg %p105
      %p300 = pneg %p129
      %p301 = pneg %p126
      %p302 = pneg %p150
      %p303 = pneg %p147
      %p304 = pneg %p171
      %p305 = pneg %p168
      %p306 = pneg %p192
      %p307 = pneg %p189
      %p308 = pneg %p218
      %p309 = pneg %p215
      %s310 = smul.u32 2, %s19
      %p311 = scmp.lt.s32.totalorder %s310, 3
      %s312 = scalar_select %p311, %s310, 3
      %s313 = smul.addr %s312, 2
      %s314 = smul.addr %s313, 8
      %s315 = scalar_lea.vmem %s8, %s314
      %s316 = smul.u32 2, %s19
      %p317 = scmp.lt.s32.totalorder %s316, 3
      %s318 = scalar_select %p317, %s316, 3
      %s319 = smul.addr %s318, 8
      %s320 = scalar_lea.vmem %s0, %s319
      %s321 = smul.u32 2, %s19
      %s322 = smul.u32 2, %s19
      %p323 = scmp.lt.s32.totalorder %s322, 3
      %s324 = scalar_select %p323, %s322, 3
      %s325 = smul.addr %s324, 2
      %s326 = smul.addr %s325, 8
      %s327 = scalar_lea.vmem %s1, %s326
      %s328 = smul.u32 2, %s19
      %s329 = smul.u32 2, %s19
      %p330 = scmp.lt.s32.totalorder %s329, 3
      %s331 = scalar_select %p330, %s329, 3
      %s332 = smul.addr %s331, 2
      %s333 = smul.addr %s332, 8
      %s334 = scalar_lea.vmem %s8, %s333
      %s335 = smul.u32 2, %s19
      %v336 = vlaneseq
      %v337 = vand.u32 %v336, 127
      %vm338 = vcmp.lt.s32.totalorder %v337, 16
      %vm339 = vcmp.eq.s32.totalorder %v337, 0
      %vm340 = vcmp.eq.s32.totalorder %v337, 127
      %v341 = vld [vmem:[%s2] sm:$0xff]
      %v342 = vld [vmem:[%s2 + $0x8] sm:$0xff]
      %v343 = vld [vmem:[%s4] sm:$0xff]
      %v344 = vld [vmem:[%s6] sm:$0xff]
      %v345 = vld [vmem:[%s3] sm:$0xff]
      %v346 = vld [vmem:[%s3 + $0x8] sm:$0xff]
      %v347 = vld [vmem:[%s5] sm:$0xff]
      %v348 = vld [vmem:[%s7] sm:$0xff]
      %v349 = vld [vmem:[%s320] sm:$0xff]
      %v350 = vld [vmem:[%s327] sm:$0xff]
      %s351 = scalar_lea.vmem %s327, 8
      %v352 = vld [vmem:[%s351] sm:$0xff]
      %354 = vset.pattern.permute.xlu0 0
      %355 = vperm.xlu0 %354, %v345
      %v356 = vpop.permute.xlu0 %355
      %359 = vset.pattern.permute.xlu0 0
      %360 = vperm.xlu0 %359, %v346
      %v361 = vpop.permute.xlu0 %360
      %vm363 = vcmask 64512
      %v365 = vsel %vm363, %v341, 0
      %v368 = vsel %vm363, %v342, 0
      %370 = vmatprep.subr.mxu0 0.0
      %371 = vmatpush1.msra.mxu0 0.0
      %372 = vmatprep.subr.mxu0 0.0
      %373 = vmatpush1.msra.mxu0 0.0
      %374 = vmatprep.subr.mxu0 0.0
      %375 = vmatpush1.msra.mxu0 0.0
      %376 = vmatprep.subr.mxu0 0.0
      %377 = vmatpush1.msra.mxu0 0.0
      %378 = vmatprep.subr.mxu0 0.0
      %379 = vmatpush1.msra.mxu0 0.0
      %380 = vmatprep.subr.mxu0 0.0
      %381 = vmatpush1.msra.mxu0 0.0
      %382 = vmatprep.subr.mxu0 0.0
      %383 = vmatpush1.msra.mxu0 0.0
      %384 = vmatprep.subr.mxu0 0.0
      %385 = vmatpush1.msra.mxu0 0.0
      %386 = vmatprep.subr.mxu0 0.0
      %387 = vmatpush1.msra.mxu0 0.0
      %388 = vmatprep.subr.mxu0 0.0
      %389 = vmatpush1.msra.mxu0 0.0
      %390 = vmatprep.subr.mxu0 0.0
      %391 = vmatpush1.msra.mxu0 0.0
      %392 = vmatprep.subr.mxu0 0.0
      %393 = vmatpush1.msra.mxu0 0.0
      %394 = vmatprep.subr.mxu0 0.0
      %395 = vmatpush1.msra.mxu0 0.0
      %396 = vmatprep.subr.mxu0 0.0
      %397 = vmatpush1.msra.mxu0 0.0
      %398 = vmatprep.subr.mxu0 0.0
      %399 = vmatpush1.msra.mxu0 0.0
      %400 = vmatprep.subr.mxu0 0.0
      %401 = vmatpush1.msra.mxu0 %v349
      %402 = vmatprep.subr.mxu0 0.0
      %403 = vmatpush2.msra.mxu0 0.0
      %404 = vmatprep.subr.mxu0 0.0
      %405 = vmatpush2.msra.mxu0 0.0
      %406 = vmatprep.subr.mxu0 0.0
      %407 = vmatpush2.msra.mxu0 0.0
      %408 = vmatprep.subr.mxu0 0.0
      %409 = vmatpush2.msra.mxu0 0.0
      %410 = vmatprep.subr.mxu0 0.0
      %411 = vmatpush2.msra.mxu0 0.0
      %412 = vmatprep.subr.mxu0 0.0
      %413 = vmatpush2.msra.mxu0 0.0
      %414 = vmatprep.subr.mxu0 0.0
      %415 = vmatpush2.msra.mxu0 0.0
      %416 = vmatprep.subr.mxu0 0.0
      %417 = vmatpush2.msra.mxu0 0.0
      %418 = vmatprep.subr.mxu0 0.0
      %419 = vmatpush2.msra.mxu0 0.0
      %420 = vmatprep.subr.mxu0 0.0
      %421 = vmatpush2.msra.mxu0 0.0
      %422 = vmatprep.subr.mxu0 0.0
      %423 = vmatpush2.msra.mxu0 0.0
      %424 = vmatprep.subr.mxu0 0.0
      %425 = vmatpush2.msra.mxu0 0.0
      %426 = vmatprep.subr.mxu0 0.0
      %427 = vmatpush2.msra.mxu0 0.0
      %428 = vmatprep.subr.mxu0 0.0
      %429 = vmatpush2.msra.mxu0 0.0
      %430 = vmatprep.subr.mxu0 0.0
      %431 = vmatpush2.msra.mxu0 0.0
      %432 = vmatprep.subr.mxu0 0.0
      %433 = vmatpush2.msra.mxu0 0.0
      %434 = vmatprep.mubr.f32.mxu0 0.0
      %435 = vmatmul.mubr.f32.gmra.mxu0 %v365
      %v436 = vpop.f32.mrf.mxu0
      %v437 = vadd.f32 %v356, %v436
      %v438 = vpop.f32.mrf.mxu0
      %439 = vmatprep.mubr.f32.mxu0 0.0
      %440 = vmatmul.mubr.f32.gmra.mxu0 %v368
      %v441 = vpop.f32.mrf.mxu0
      %v442 = vadd.f32 %v361, %v441
      %v443 = vpop.f32.mrf.mxu0
      %444 = vdwg.mxu0
      %v445 = vsel %vm338, %v437, 0.0
      %v446 = vsel %vm338, %v442, 0.0
      %447 = vrot.lane.b32.xlu0 %v446, 1
      %v448 = vpop.permute.xlu0 %447
      %v449 = vsel %vm339, 0.0, %v448
      %450 = vrot.lane.b32.xlu0 %v352, 1
      %v451 = vpop.permute.xlu0 %450
      %v452 = vsel %vm339, 0.0, %v451
      %453 = vrot.lane.b32.xlu0 %v445, 127
      %v454 = vpop.permute.xlu0 %453
      %v455 = vsel %vm340, 0.0, %v454
      %456 = vrot.lane.b32.xlu0 %v350, 127
      %v457 = vpop.permute.xlu0 %456
      %v458 = vsel %vm340, 0.0, %v457
      %460 = vset.pattern.permute.xlu0 0
      %461 = vperm.xlu0 %460, %v347
      %v462 = vpop.permute.xlu0 %461
      %vm464 = vcmask 392192
      %v466 = vsel %vm464, %v343, 0
      %468 = vmatprep.subr.mxu0 0.0
      %469 = vmatpush1.msra.mxu0 0.0
      %470 = vmatprep.subr.mxu0 0.0
      %471 = vmatpush1.msra.mxu0 0.0
      %472 = vmatprep.subr.mxu0 0.0
      %473 = vmatpush1.msra.mxu0 0.0
      %474 = vmatprep.subr.mxu0 0.0
      %475 = vmatpush1.msra.mxu0 0.0
      %476 = vmatprep.subr.mxu0 0.0
      %477 = vmatpush1.msra.mxu0 0.0
      %478 = vmatprep.subr.mxu0 0.0
      %479 = vmatpush1.msra.mxu0 0.0
      %480 = vmatprep.subr.mxu0 0.0
      %481 = vmatpush1.msra.mxu0 0.0
      %482 = vmatprep.subr.mxu0 0.0
      %483 = vmatpush1.msra.mxu0 0.0
      %484 = vmatprep.subr.mxu0 0.0
      %485 = vmatpush1.msra.mxu0 0.0
      %486 = vmatprep.subr.mxu0 0.0
      %487 = vmatpush1.msra.mxu0 0.0
      %488 = vmatprep.subr.mxu0 0.0
      %489 = vmatpush1.msra.mxu0 %v352
      %490 = vmatprep.subr.mxu0 0.0
      %491 = vmatpush1.msra.mxu0 %v350
      %492 = vmatprep.subr.mxu0 0.0
      %493 = vmatpush1.msra.mxu0 %v452
      %494 = vmatprep.subr.mxu0 0.0
      %495 = vmatpush1.msra.mxu0 %v446
      %496 = vmatprep.subr.mxu0 0.0
      %497 = vmatpush1.msra.mxu0 %v445
      %498 = vmatprep.subr.mxu0 0.0
      %499 = vmatpush1.msra.mxu0 %v449
      %500 = vmatprep.subr.mxu0 0.0
      %501 = vmatpush2.msra.mxu0 0.0
      %502 = vmatprep.subr.mxu0 0.0
      %503 = vmatpush2.msra.mxu0 0.0
      %504 = vmatprep.subr.mxu0 0.0
      %505 = vmatpush2.msra.mxu0 0.0
      %506 = vmatprep.subr.mxu0 0.0
      %507 = vmatpush2.msra.mxu0 0.0
      %508 = vmatprep.subr.mxu0 0.0
      %509 = vmatpush2.msra.mxu0 0.0
      %510 = vmatprep.subr.mxu0 0.0
      %511 = vmatpush2.msra.mxu0 0.0
      %512 = vmatprep.subr.mxu0 0.0
      %513 = vmatpush2.msra.mxu0 0.0
      %514 = vmatprep.subr.mxu0 0.0
      %515 = vmatpush2.msra.mxu0 0.0
      %516 = vmatprep.subr.mxu0 0.0
      %517 = vmatpush2.msra.mxu0 0.0
      %518 = vmatprep.subr.mxu0 0.0
      %519 = vmatpush2.msra.mxu0 0.0
      %520 = vmatprep.subr.mxu0 0.0
      %521 = vmatpush2.msra.mxu0 0.0
      %522 = vmatprep.subr.mxu0 0.0
      %523 = vmatpush2.msra.mxu0 0.0
      %524 = vmatprep.subr.mxu0 0.0
      %525 = vmatpush2.msra.mxu0 0.0
      %526 = vmatprep.subr.mxu0 0.0
      %527 = vmatpush2.msra.mxu0 0.0
      %528 = vmatprep.subr.mxu0 0.0
      %529 = vmatpush2.msra.mxu0 0.0
      %530 = vmatprep.subr.mxu0 0.0
      %531 = vmatpush2.msra.mxu0 0.0
      %532 = vmatprep.mubr.f32.mxu0 0.0
      %533 = vmatmul.mubr.f32.gmra.mxu0 %v466
      %v534 = vpop.f32.mrf.mxu0
      %v535 = vadd.f32 %v462, %v534
      %v536 = vpop.f32.mrf.mxu0
      %537 = vdwg.mxu0
      %v538 = vmax.f32 %v535, 0.0
      %v539 = vsel %vm338, %v538, 0.0
      %540 = vmatprep.subr.mxu0 0.0
      %541 = vmatpush1.msra.mxu0 0.0
      %542 = vmatprep.subr.mxu0 0.0
      %543 = vmatpush1.msra.mxu0 0.0
      %544 = vmatprep.subr.mxu0 0.0
      %545 = vmatpush1.msra.mxu0 0.0
      %546 = vmatprep.subr.mxu0 0.0
      %547 = vmatpush1.msra.mxu0 0.0
      %548 = vmatprep.subr.mxu0 0.0
      %549 = vmatpush1.msra.mxu0 0.0
      %550 = vmatprep.subr.mxu0 0.0
      %551 = vmatpush1.msra.mxu0 0.0
      %552 = vmatprep.subr.mxu0 0.0
      %553 = vmatpush1.msra.mxu0 0.0
      %554 = vmatprep.subr.mxu0 0.0
      %555 = vmatpush1.msra.mxu0 0.0
      %556 = vmatprep.subr.mxu0 0.0
      %557 = vmatpush1.msra.mxu0 0.0
      %558 = vmatprep.subr.mxu0 0.0
      %559 = vmatpush1.msra.mxu0 0.0
      %560 = vmatprep.subr.mxu0 0.0
      %561 = vmatpush1.msra.mxu0 %v458
      %562 = vmatprep.subr.mxu0 0.0
      %563 = vmatpush1.msra.mxu0 %v352
      %564 = vmatprep.subr.mxu0 0.0
      %565 = vmatpush1.msra.mxu0 %v350
      %566 = vmatprep.subr.mxu0 0.0
      %567 = vmatpush1.msra.mxu0 %v455
      %568 = vmatprep.subr.mxu0 0.0
      %569 = vmatpush1.msra.mxu0 %v446
      %570 = vmatprep.subr.mxu0 0.0
      %571 = vmatpush1.msra.mxu0 %v445
      %572 = vmatprep.subr.mxu0 0.0
      %573 = vmatpush2.msra.mxu0 0.0
      %574 = vmatprep.subr.mxu0 0.0
      %575 = vmatpush2.msra.mxu0 0.0
      %576 = vmatprep.subr.mxu0 0.0
      %577 = vmatpush2.msra.mxu0 0.0
      %578 = vmatprep.subr.mxu0 0.0
      %579 = vmatpush2.msra.mxu0 0.0
      %580 = vmatprep.subr.mxu0 0.0
      %581 = vmatpush2.msra.mxu0 0.0
      %582 = vmatprep.subr.mxu0 0.0
      %583 = vmatpush2.msra.mxu0 0.0
      %584 = vmatprep.subr.mxu0 0.0
      %585 = vmatpush2.msra.mxu0 0.0
      %586 = vmatprep.subr.mxu0 0.0
      %587 = vmatpush2.msra.mxu0 0.0
      %588 = vmatprep.subr.mxu0 0.0
      %589 = vmatpush2.msra.mxu0 0.0
      %590 = vmatprep.subr.mxu0 0.0
      %591 = vmatpush2.msra.mxu0 0.0
      %592 = vmatprep.subr.mxu0 0.0
      %593 = vmatpush2.msra.mxu0 0.0
      %594 = vmatprep.subr.mxu0 0.0
      %595 = vmatpush2.msra.mxu0 0.0
      %596 = vmatprep.subr.mxu0 0.0
      %597 = vmatpush2.msra.mxu0 0.0
      %598 = vmatprep.subr.mxu0 0.0
      %599 = vmatpush2.msra.mxu0 0.0
      %600 = vmatprep.subr.mxu0 0.0
      %601 = vmatpush2.msra.mxu0 0.0
      %602 = vmatprep.subr.mxu0 0.0
      %603 = vmatpush2.msra.mxu0 0.0
      %604 = vmatprep.mubr.f32.mxu0 0.0
      %605 = vmatmul.mubr.f32.gmra.mxu0 %v466
      %v606 = vpop.f32.mrf.mxu0
      %v607 = vadd.f32 %v462, %v606
      %v608 = vpop.f32.mrf.mxu0
      %609 = vdwg.mxu0
      %v610 = vmax.f32 %v607, 0.0
      %v611 = vsel %vm338, %v610, 0.0
      %612 = vrot.lane.b32.xlu0 %v611, 1
      %v613 = vpop.permute.xlu0 %612
      %v614 = vsel %vm339, 0.0, %v613
      %615 = vrot.lane.b32.xlu0 %v539, 127
      %v616 = vpop.permute.xlu0 %615
      %v617 = vsel %vm340, 0.0, %v616
      %619 = vset.pattern.permute.xlu0 0
      %620 = vperm.xlu0 %619, %v348
      %v621 = vpop.permute.xlu0 %620
      %vm623 = vcmask 195584
      %v625 = vsel %vm623, %v344, 0
      %627 = vmatprep.subr.mxu0 0.0
      %628 = vmatpush1.msra.mxu0 0.0
      %629 = vmatprep.subr.mxu0 0.0
      %630 = vmatpush1.msra.mxu0 0.0
      %631 = vmatprep.subr.mxu0 0.0
      %632 = vmatpush1.msra.mxu0 0.0
      %633 = vmatprep.subr.mxu0 0.0
      %634 = vmatpush1.msra.mxu0 0.0
      %635 = vmatprep.subr.mxu0 0.0
      %636 = vmatpush1.msra.mxu0 0.0
      %637 = vmatprep.subr.mxu0 0.0
      %638 = vmatpush1.msra.mxu0 0.0
      %639 = vmatprep.subr.mxu0 0.0
      %640 = vmatpush1.msra.mxu0 0.0
      %641 = vmatprep.subr.mxu0 0.0
      %642 = vmatpush1.msra.mxu0 0.0
      %643 = vmatprep.subr.mxu0 0.0
      %644 = vmatpush1.msra.mxu0 0.0
      %645 = vmatprep.subr.mxu0 0.0
      %646 = vmatpush1.msra.mxu0 0.0
      %647 = vmatprep.subr.mxu0 0.0
      %648 = vmatpush1.msra.mxu0 0.0
      %649 = vmatprep.subr.mxu0 0.0
      %650 = vmatpush1.msra.mxu0 0.0
      %651 = vmatprep.subr.mxu0 0.0
      %652 = vmatpush1.msra.mxu0 0.0
      %653 = vmatprep.subr.mxu0 0.0
      %654 = vmatpush1.msra.mxu0 %v611
      %655 = vmatprep.subr.mxu0 0.0
      %656 = vmatpush1.msra.mxu0 %v539
      %657 = vmatprep.subr.mxu0 0.0
      %658 = vmatpush1.msra.mxu0 %v614
      %659 = vmatprep.subr.mxu0 0.0
      %660 = vmatpush2.msra.mxu0 0.0
      %661 = vmatprep.subr.mxu0 0.0
      %662 = vmatpush2.msra.mxu0 0.0
      %663 = vmatprep.subr.mxu0 0.0
      %664 = vmatpush2.msra.mxu0 0.0
      %665 = vmatprep.subr.mxu0 0.0
      %666 = vmatpush2.msra.mxu0 0.0
      %667 = vmatprep.subr.mxu0 0.0
      %668 = vmatpush2.msra.mxu0 0.0
      %669 = vmatprep.subr.mxu0 0.0
      %670 = vmatpush2.msra.mxu0 0.0
      %671 = vmatprep.subr.mxu0 0.0
      %672 = vmatpush2.msra.mxu0 0.0
      %673 = vmatprep.subr.mxu0 0.0
      %674 = vmatpush2.msra.mxu0 0.0
      %675 = vmatprep.subr.mxu0 0.0
      %676 = vmatpush2.msra.mxu0 0.0
      %677 = vmatprep.subr.mxu0 0.0
      %678 = vmatpush2.msra.mxu0 0.0
      %679 = vmatprep.subr.mxu0 0.0
      %680 = vmatpush2.msra.mxu0 0.0
      %681 = vmatprep.subr.mxu0 0.0
      %682 = vmatpush2.msra.mxu0 0.0
      %683 = vmatprep.subr.mxu0 0.0
      %684 = vmatpush2.msra.mxu0 0.0
      %685 = vmatprep.subr.mxu0 0.0
      %686 = vmatpush2.msra.mxu0 0.0
      %687 = vmatprep.subr.mxu0 0.0
      %688 = vmatpush2.msra.mxu0 0.0
      %689 = vmatprep.subr.mxu0 0.0
      %690 = vmatpush2.msra.mxu0 0.0
      %691 = vmatprep.mubr.f32.mxu0 0.0
      %692 = vmatmul.mubr.f32.gmra.mxu0 %v625
      %v693 = vpop.f32.mrf.mxu0
      %v694 = vadd.f32 %v621, %v693
      %v695 = vpop.f32.mrf.mxu0
      %696 = vdwg.mxu0
      %v697 = vmax.f32 %v694, 0.0
      %v698 = vsel %vm338, %v697, 0.0
      %699 = vmatprep.subr.mxu0 0.0
      %700 = vmatpush1.msra.mxu0 0.0
      %701 = vmatprep.subr.mxu0 0.0
      %702 = vmatpush1.msra.mxu0 0.0
      %703 = vmatprep.subr.mxu0 0.0
      %704 = vmatpush1.msra.mxu0 0.0
      %705 = vmatprep.subr.mxu0 0.0
      %706 = vmatpush1.msra.mxu0 0.0
      %707 = vmatprep.subr.mxu0 0.0
      %708 = vmatpush1.msra.mxu0 0.0
      %709 = vmatprep.subr.mxu0 0.0
      %710 = vmatpush1.msra.mxu0 0.0
      %711 = vmatprep.subr.mxu0 0.0
      %712 = vmatpush1.msra.mxu0 0.0
      %713 = vmatprep.subr.mxu0 0.0
      %714 = vmatpush1.msra.mxu0 0.0
      %715 = vmatprep.subr.mxu0 0.0
      %716 = vmatpush1.msra.mxu0 0.0
      %717 = vmatprep.subr.mxu0 0.0
      %718 = vmatpush1.msra.mxu0 0.0
      %719 = vmatprep.subr.mxu0 0.0
      %720 = vmatpush1.msra.mxu0 0.0
      %721 = vmatprep.subr.mxu0 0.0
      %722 = vmatpush1.msra.mxu0 0.0
      %723 = vmatprep.subr.mxu0 0.0
      %724 = vmatpush1.msra.mxu0 0.0
      %725 = vmatprep.subr.mxu0 0.0
      %726 = vmatpush1.msra.mxu0 %v617
      %727 = vmatprep.subr.mxu0 0.0
      %728 = vmatpush1.msra.mxu0 %v611
      %729 = vmatprep.subr.mxu0 0.0
      %730 = vmatpush1.msra.mxu0 %v539
      %731 = vmatprep.subr.mxu0 0.0
      %732 = vmatpush2.msra.mxu0 0.0
      %733 = vmatprep.subr.mxu0 0.0
      %734 = vmatpush2.msra.mxu0 0.0
      %735 = vmatprep.subr.mxu0 0.0
      %736 = vmatpush2.msra.mxu0 0.0
      %737 = vmatprep.subr.mxu0 0.0
      %738 = vmatpush2.msra.mxu0 0.0
      %739 = vmatprep.subr.mxu0 0.0
      %740 = vmatpush2.msra.mxu0 0.0
      %741 = vmatprep.subr.mxu0 0.0
      %742 = vmatpush2.msra.mxu0 0.0
      %743 = vmatprep.subr.mxu0 0.0
      %744 = vmatpush2.msra.mxu0 0.0
      %745 = vmatprep.subr.mxu0 0.0
      %746 = vmatpush2.msra.mxu0 0.0
      %747 = vmatprep.subr.mxu0 0.0
      %748 = vmatpush2.msra.mxu0 0.0
      %749 = vmatprep.subr.mxu0 0.0
      %750 = vmatpush2.msra.mxu0 0.0
      %751 = vmatprep.subr.mxu0 0.0
      %752 = vmatpush2.msra.mxu0 0.0
      %753 = vmatprep.subr.mxu0 0.0
      %754 = vmatpush2.msra.mxu0 0.0
      %755 = vmatprep.subr.mxu0 0.0
      %756 = vmatpush2.msra.mxu0 0.0
      %757 = vmatprep.subr.mxu0 0.0
      %758 = vmatpush2.msra.mxu0 0.0
      %759 = vmatprep.subr.mxu0 0.0
      %760 = vmatpush2.msra.mxu0 0.0
      %761 = vmatprep.subr.mxu0 0.0
      %762 = vmatpush2.msra.mxu0 0.0
      %763 = vmatprep.mubr.f32.mxu0 0.0
      %764 = vmatmul.mubr.f32.gmra.mxu0 %v625
      %v765 = vpop.f32.mrf.mxu0
      %v766 = vadd.f32 %v621, %v765
      %v767 = vpop.f32.mrf.mxu0
      %768 = vdwg.mxu0
      %v769 = vmax.f32 %v766, 0.0
      %v770 = vsel %vm338, %v769, 0.0
      %771 = vst [vmem:[%s334] sm:$0xff] %v698
      %s772 = scalar_lea.vmem %s334, 8
      %773 = vst [vmem:[%s772] sm:$0xff] %v770
      %s774 = scalar_lea.vmem %s320, 8
      %v775 = vld [vmem:[%s774] sm:$0xff]
      %s776 = scalar_lea.vmem %s327, 16
      %v777 = vld [vmem:[%s776] sm:$0xff]
      %s778 = scalar_lea.vmem %s327, 24
      %v779 = vld [vmem:[%s778] sm:$0xff]
      %780 = vmatprep.subr.mxu0 0.0
      %781 = vmatpush1.msra.mxu0 0.0
      %782 = vmatprep.subr.mxu0 0.0
      %783 = vmatpush1.msra.mxu0 0.0
      %784 = vmatprep.subr.mxu0 0.0
      %785 = vmatpush1.msra.mxu0 0.0
      %786 = vmatprep.subr.mxu0 0.0
      %787 = vmatpush1.msra.mxu0 0.0
      %788 = vmatprep.subr.mxu0 0.0
      %789 = vmatpush1.msra.mxu0 0.0
      %790 = vmatprep.subr.mxu0 0.0
      %791 = vmatpush1.msra.mxu0 0.0
      %792 = vmatprep.subr.mxu0 0.0
      %793 = vmatpush1.msra.mxu0 0.0
      %794 = vmatprep.subr.mxu0 0.0
      %795 = vmatpush1.msra.mxu0 0.0
      %796 = vmatprep.subr.mxu0 0.0
      %797 = vmatpush1.msra.mxu0 0.0
      %798 = vmatprep.subr.mxu0 0.0
      %799 = vmatpush1.msra.mxu0 0.0
      %800 = vmatprep.subr.mxu0 0.0
      %801 = vmatpush1.msra.mxu0 0.0
      %802 = vmatprep.subr.mxu0 0.0
      %803 = vmatpush1.msra.mxu0 0.0
      %804 = vmatprep.subr.mxu0 0.0
      %805 = vmatpush1.msra.mxu0 0.0
      %806 = vmatprep.subr.mxu0 0.0
      %807 = vmatpush1.msra.mxu0 0.0
      %808 = vmatprep.subr.mxu0 0.0
      %809 = vmatpush1.msra.mxu0 0.0
      %810 = vmatprep.subr.mxu0 0.0
      %811 = vmatpush1.msra.mxu0 %v775
      %812 = vmatprep.subr.mxu0 0.0
      %813 = vmatpush2.msra.mxu0 0.0
      %814 = vmatprep.subr.mxu0 0.0
      %815 = vmatpush2.msra.mxu0 0.0
      %816 = vmatprep.subr.mxu0 0.0
      %817 = vmatpush2.msra.mxu0 0.0
      %818 = vmatprep.subr.mxu0 0.0
      %819 = vmatpush2.msra.mxu0 0.0
      %820 = vmatprep.subr.mxu0 0.0
      %821 = vmatpush2.msra.mxu0 0.0
      %822 = vmatprep.subr.mxu0 0.0
      %823 = vmatpush2.msra.mxu0 0.0
      %824 = vmatprep.subr.mxu0 0.0
      %825 = vmatpush2.msra.mxu0 0.0
      %826 = vmatprep.subr.mxu0 0.0
      %827 = vmatpush2.msra.mxu0 0.0
      %828 = vmatprep.subr.mxu0 0.0
      %829 = vmatpush2.msra.mxu0 0.0
      %830 = vmatprep.subr.mxu0 0.0
      %831 = vmatpush2.msra.mxu0 0.0
      %832 = vmatprep.subr.mxu0 0.0
      %833 = vmatpush2.msra.mxu0 0.0
      %834 = vmatprep.subr.mxu0 0.0
      %835 = vmatpush2.msra.mxu0 0.0
      %836 = vmatprep.subr.mxu0 0.0
      %837 = vmatpush2.msra.mxu0 0.0
      %838 = vmatprep.subr.mxu0 0.0
      %839 = vmatpush2.msra.mxu0 0.0
      %840 = vmatprep.subr.mxu0 0.0
      %841 = vmatpush2.msra.mxu0 0.0
      %842 = vmatprep.subr.mxu0 0.0
      %843 = vmatpush2.msra.mxu0 0.0
      %844 = vmatprep.mubr.f32.mxu0 0.0
      %845 = vmatmul.mubr.f32.gmra.mxu0 %v365
      %v846 = vpop.f32.mrf.mxu0
      %v847 = vadd.f32 %v356, %v846
      %v848 = vpop.f32.mrf.mxu0
      %849 = vmatprep.mubr.f32.mxu0 0.0
      %850 = vmatmul.mubr.f32.gmra.mxu0 %v368
      %v851 = vpop.f32.mrf.mxu0
      %v852 = vadd.f32 %v361, %v851
      %v853 = vpop.f32.mrf.mxu0
      %854 = vdwg.mxu0
      %v855 = vsel %vm338, %v847, 0.0
      %v856 = vsel %vm338, %v852, 0.0
      %857 = vrot.lane.b32.xlu0 %v856, 1
      %v858 = vpop.permute.xlu0 %857
      %v859 = vsel %vm339, 0.0, %v858
      %860 = vrot.lane.b32.xlu0 %v779, 1
      %v861 = vpop.permute.xlu0 %860
      %v862 = vsel %vm339, 0.0, %v861
      %863 = vrot.lane.b32.xlu0 %v855, 127
      %v864 = vpop.permute.xlu0 %863
      %v865 = vsel %vm340, 0.0, %v864
      %866 = vrot.lane.b32.xlu0 %v777, 127
      %v867 = vpop.permute.xlu0 %866
      %v868 = vsel %vm340, 0.0, %v867
      %869 = vmatprep.subr.mxu0 0.0
      %870 = vmatpush1.msra.mxu0 0.0
      %871 = vmatprep.subr.mxu0 0.0
      %872 = vmatpush1.msra.mxu0 0.0
      %873 = vmatprep.subr.mxu0 0.0
      %874 = vmatpush1.msra.mxu0 0.0
      %875 = vmatprep.subr.mxu0 0.0
      %876 = vmatpush1.msra.mxu0 0.0
      %877 = vmatprep.subr.mxu0 0.0
      %878 = vmatpush1.msra.mxu0 0.0
      %879 = vmatprep.subr.mxu0 0.0
      %880 = vmatpush1.msra.mxu0 0.0
      %881 = vmatprep.subr.mxu0 0.0
      %882 = vmatpush1.msra.mxu0 0.0
      %883 = vmatprep.subr.mxu0 0.0
      %884 = vmatpush1.msra.mxu0 0.0
      %885 = vmatprep.subr.mxu0 0.0
      %886 = vmatpush1.msra.mxu0 0.0
      %887 = vmatprep.subr.mxu0 0.0
      %888 = vmatpush1.msra.mxu0 0.0
      %889 = vmatprep.subr.mxu0 0.0
      %890 = vmatpush1.msra.mxu0 %v779
      %891 = vmatprep.subr.mxu0 0.0
      %892 = vmatpush1.msra.mxu0 %v777
      %893 = vmatprep.subr.mxu0 0.0
      %894 = vmatpush1.msra.mxu0 %v862
      %895 = vmatprep.subr.mxu0 0.0
      %896 = vmatpush1.msra.mxu0 %v856
      %897 = vmatprep.subr.mxu0 0.0
      %898 = vmatpush1.msra.mxu0 %v855
      %899 = vmatprep.subr.mxu0 0.0
      %900 = vmatpush1.msra.mxu0 %v859
      %901 = vmatprep.subr.mxu0 0.0
      %902 = vmatpush2.msra.mxu0 0.0
      %903 = vmatprep.subr.mxu0 0.0
      %904 = vmatpush2.msra.mxu0 0.0
      %905 = vmatprep.subr.mxu0 0.0
      %906 = vmatpush2.msra.mxu0 0.0
      %907 = vmatprep.subr.mxu0 0.0
      %908 = vmatpush2.msra.mxu0 0.0
      %909 = vmatprep.subr.mxu0 0.0
      %910 = vmatpush2.msra.mxu0 0.0
      %911 = vmatprep.subr.mxu0 0.0
      %912 = vmatpush2.msra.mxu0 0.0
      %913 = vmatprep.subr.mxu0 0.0
      %914 = vmatpush2.msra.mxu0 0.0
      %915 = vmatprep.subr.mxu0 0.0
      %916 = vmatpush2.msra.mxu0 0.0
      %917 = vmatprep.subr.mxu0 0.0
      %918 = vmatpush2.msra.mxu0 0.0
      %919 = vmatprep.subr.mxu0 0.0
      %920 = vmatpush2.msra.mxu0 0.0
      %921 = vmatprep.subr.mxu0 0.0
      %922 = vmatpush2.msra.mxu0 0.0
      %923 = vmatprep.subr.mxu0 0.0
      %924 = vmatpush2.msra.mxu0 0.0
      %925 = vmatprep.subr.mxu0 0.0
      %926 = vmatpush2.msra.mxu0 0.0
      %927 = vmatprep.subr.mxu0 0.0
      %928 = vmatpush2.msra.mxu0 0.0
      %929 = vmatprep.subr.mxu0 0.0
      %930 = vmatpush2.msra.mxu0 0.0
      %931 = vmatprep.subr.mxu0 0.0
      %932 = vmatpush2.msra.mxu0 0.0
      %933 = vmatprep.mubr.f32.mxu0 0.0
      %934 = vmatmul.mubr.f32.gmra.mxu0 %v466
      %v935 = vpop.f32.mrf.mxu0
      %v936 = vadd.f32 %v462, %v935
      %v937 = vpop.f32.mrf.mxu0
      %938 = vdwg.mxu0
      %v939 = vmax.f32 %v936, 0.0
      %v940 = vsel %vm338, %v939, 0.0
      %941 = vmatprep.subr.mxu0 0.0
      %942 = vmatpush1.msra.mxu0 0.0
      %943 = vmatprep.subr.mxu0 0.0
      %944 = vmatpush1.msra.mxu0 0.0
      %945 = vmatprep.subr.mxu0 0.0
      %946 = vmatpush1.msra.mxu0 0.0
      %947 = vmatprep.subr.mxu0 0.0
      %948 = vmatpush1.msra.mxu0 0.0
      %949 = vmatprep.subr.mxu0 0.0
      %950 = vmatpush1.msra.mxu0 0.0
      %951 = vmatprep.subr.mxu0 0.0
      %952 = vmatpush1.msra.mxu0 0.0
      %953 = vmatprep.subr.mxu0 0.0
      %954 = vmatpush1.msra.mxu0 0.0
      %955 = vmatprep.subr.mxu0 0.0
      %956 = vmatpush1.msra.mxu0 0.0
      %957 = vmatprep.subr.mxu0 0.0
      %958 = vmatpush1.msra.mxu0 0.0
      %959 = vmatprep.subr.mxu0 0.0
      %960 = vmatpush1.msra.mxu0 0.0
      %961 = vmatprep.subr.mxu0 0.0
      %962 = vmatpush1.msra.mxu0 %v868
      %963 = vmatprep.subr.mxu0 0.0
      %964 = vmatpush1.msra.mxu0 %v779
      %965 = vmatprep.subr.mxu0 0.0
      %966 = vmatpush1.msra.mxu0 %v777
      %967 = vmatprep.subr.mxu0 0.0
      %968 = vmatpush1.msra.mxu0 %v865
      %969 = vmatprep.subr.mxu0 0.0
      %970 = vmatpush1.msra.mxu0 %v856
      %971 = vmatprep.subr.mxu0 0.0
      %972 = vmatpush1.msra.mxu0 %v855
      %973 = vmatprep.subr.mxu0 0.0
      %974 = vmatpush2.msra.mxu0 0.0
      %975 = vmatprep.subr.mxu0 0.0
      %976 = vmatpush2.msra.mxu0 0.0
      %977 = vmatprep.subr.mxu0 0.0
      %978 = vmatpush2.msra.mxu0 0.0
      %979 = vmatprep.subr.mxu0 0.0
      %980 = vmatpush2.msra.mxu0 0.0
      %981 = vmatprep.subr.mxu0 0.0
      %982 = vmatpush2.msra.mxu0 0.0
      %983 = vmatprep.subr.mxu0 0.0
      %984 = vmatpush2.msra.mxu0 0.0
      %985 = vmatprep.subr.mxu0 0.0
      %986 = vmatpush2.msra.mxu0 0.0
      %987 = vmatprep.subr.mxu0 0.0
      %988 = vmatpush2.msra.mxu0 0.0
      %989 = vmatprep.subr.mxu0 0.0
      %990 = vmatpush2.msra.mxu0 0.0
      %991 = vmatprep.subr.mxu0 0.0
      %992 = vmatpush2.msra.mxu0 0.0
      %993 = vmatprep.subr.mxu0 0.0
      %994 = vmatpush2.msra.mxu0 0.0
      %995 = vmatprep.subr.mxu0 0.0
      %996 = vmatpush2.msra.mxu0 0.0
      %997 = vmatprep.subr.mxu0 0.0
      %998 = vmatpush2.msra.mxu0 0.0
      %999 = vmatprep.subr.mxu0 0.0
      %1000 = vmatpush2.msra.mxu0 0.0
      %1001 = vmatprep.subr.mxu0 0.0
      %1002 = vmatpush2.msra.mxu0 0.0
      %1003 = vmatprep.subr.mxu0 0.0
      %1004 = vmatpush2.msra.mxu0 0.0
      %1005 = vmatprep.mubr.f32.mxu0 0.0
      %1006 = vmatmul.mubr.f32.gmra.mxu0 %v466
      %v1007 = vpop.f32.mrf.mxu0
      %v1008 = vadd.f32 %v462, %v1007
      %v1009 = vpop.f32.mrf.mxu0
      %1010 = vdwg.mxu0
      %v1011 = vmax.f32 %v1008, 0.0
      %v1012 = vsel %vm338, %v1011, 0.0
      %1013 = vrot.lane.b32.xlu0 %v1012, 1
      %v1014 = vpop.permute.xlu0 %1013
      %v1015 = vsel %vm339, 0.0, %v1014
      %1016 = vrot.lane.b32.xlu0 %v940, 127
      %v1017 = vpop.permute.xlu0 %1016
      %v1018 = vsel %vm340, 0.0, %v1017
      %1019 = vmatprep.subr.mxu0 0.0
      %1020 = vmatpush1.msra.mxu0 0.0
      %1021 = vmatprep.subr.mxu0 0.0
      %1022 = vmatpush1.msra.mxu0 0.0
      %1023 = vmatprep.subr.mxu0 0.0
      %1024 = vmatpush1.msra.mxu0 0.0
      %1025 = vmatprep.subr.mxu0 0.0
      %1026 = vmatpush1.msra.mxu0 0.0
      %1027 = vmatprep.subr.mxu0 0.0
      %1028 = vmatpush1.msra.mxu0 0.0
      %1029 = vmatprep.subr.mxu0 0.0
      %1030 = vmatpush1.msra.mxu0 0.0
      %1031 = vmatprep.subr.mxu0 0.0
      %1032 = vmatpush1.msra.mxu0 0.0
      %1033 = vmatprep.subr.mxu0 0.0
      %1034 = vmatpush1.msra.mxu0 0.0
      %1035 = vmatprep.subr.mxu0 0.0
      %1036 = vmatpush1.msra.mxu0 0.0
      %1037 = vmatprep.subr.mxu0 0.0
      %1038 = vmatpush1.msra.mxu0 0.0
      %1039 = vmatprep.subr.mxu0 0.0
      %1040 = vmatpush1.msra.mxu0 0.0
      %1041 = vmatprep.subr.mxu0 0.0
      %1042 = vmatpush1.msra.mxu0 0.0
      %1043 = vmatprep.subr.mxu0 0.0
      %1044 = vmatpush1.msra.mxu0 0.0
      %1045 = vmatprep.subr.mxu0 0.0
      %1046 = vmatpush1.msra.mxu0 %v1012
      %1047 = vmatprep.subr.mxu0 0.0
      %1048 = vmatpush1.msra.mxu0 %v940
      %1049 = vmatprep.subr.mxu0 0.0
      %1050 = vmatpush1.msra.mxu0 %v1015
      %1051 = vmatprep.subr.mxu0 0.0
      %1052 = vmatpush2.msra.mxu0 0.0
      %1053 = vmatprep.subr.mxu0 0.0
      %1054 = vmatpush2.msra.mxu0 0.0
      %1055 = vmatprep.subr.mxu0 0.0
      %1056 = vmatpush2.msra.mxu0 0.0
      %1057 = vmatprep.subr.mxu0 0.0
      %1058 = vmatpush2.msra.mxu0 0.0
      %1059 = vmatprep.subr.mxu0 0.0
      %1060 = vmatpush2.msra.mxu0 0.0
      %1061 = vmatprep.subr.mxu0 0.0
      %1062 = vmatpush2.msra.mxu0 0.0
      %1063 = vmatprep.subr.mxu0 0.0
      %1064 = vmatpush2.msra.mxu0 0.0
      %1065 = vmatprep.subr.mxu0 0.0
      %1066 = vmatpush2.msra.mxu0 0.0
      %1067 = vmatprep.subr.mxu0 0.0
      %1068 = vmatpush2.msra.mxu0 0.0
      %1069 = vmatprep.subr.mxu0 0.0
      %1070 = vmatpush2.msra.mxu0 0.0
      %1071 = vmatprep.subr.mxu0 0.0
      %1072 = vmatpush2.msra.mxu0 0.0
      %1073 = vmatprep.subr.mxu0 0.0
      %1074 = vmatpush2.msra.mxu0 0.0
      %1075 = vmatprep.subr.mxu0 0.0
      %1076 = vmatpush2.msra.mxu0 0.0
      %1077 = vmatprep.subr.mxu0 0.0
      %1078 = vmatpush2.msra.mxu0 0.0
      %1079 = vmatprep.subr.mxu0 0.0
      %1080 = vmatpush2.msra.mxu0 0.0
      %1081 = vmatprep.subr.mxu0 0.0
      %1082 = vmatpush2.msra.mxu0 0.0
      %1083 = vmatprep.mubr.f32.mxu0 0.0
      %1084 = vmatmul.mubr.f32.gmra.mxu0 %v625
      %v1085 = vpop.f32.mrf.mxu0
      %v1086 = vadd.f32 %v621, %v1085
      %v1087 = vpop.f32.mrf.mxu0
      %1088 = vdwg.mxu0
      %v1089 = vmax.f32 %v1086, 0.0
      %v1090 = vsel %vm338, %v1089, 0.0
      %1091 = vmatprep.subr.mxu0 0.0
      %1092 = vmatpush1.msra.mxu0 0.0
      %1093 = vmatprep.subr.mxu0 0.0
      %1094 = vmatpush1.msra.mxu0 0.0
      %1095 = vmatprep.subr.mxu0 0.0
      %1096 = vmatpush1.msra.mxu0 0.0
      %1097 = vmatprep.subr.mxu0 0.0
      %1098 = vmatpush1.msra.mxu0 0.0
      %1099 = vmatprep.subr.mxu0 0.0
      %1100 = vmatpush1.msra.mxu0 0.0
      %1101 = vmatprep.subr.mxu0 0.0
      %1102 = vmatpush1.msra.mxu0 0.0
      %1103 = vmatprep.subr.mxu0 0.0
      %1104 = vmatpush1.msra.mxu0 0.0
      %1105 = vmatprep.subr.mxu0 0.0
      %1106 = vmatpush1.msra.mxu0 0.0
      %1107 = vmatprep.subr.mxu0 0.0
      %1108 = vmatpush1.msra.mxu0 0.0
      %1109 = vmatprep.subr.mxu0 0.0
      %1110 = vmatpush1.msra.mxu0 0.0
      %1111 = vmatprep.subr.mxu0 0.0
      %1112 = vmatpush1.msra.mxu0 0.0
      %1113 = vmatprep.subr.mxu0 0.0
      %1114 = vmatpush1.msra.mxu0 0.0
      %1115 = vmatprep.subr.mxu0 0.0
      %1116 = vmatpush1.msra.mxu0 0.0
      %1117 = vmatprep.subr.mxu0 0.0
      %1118 = vmatpush1.msra.mxu0 %v1018
      %1119 = vmatprep.subr.mxu0 0.0
      %1120 = vmatpush1.msra.mxu0 %v1012
      %1121 = vmatprep.subr.mxu0 0.0
      %1122 = vmatpush1.msra.mxu0 %v940
      %1123 = vmatprep.subr.mxu0 0.0
      %1124 = vmatpush2.msra.mxu0 0.0
      %1125 = vmatprep.subr.mxu0 0.0
      %1126 = vmatpush2.msra.mxu0 0.0
      %1127 = vmatprep.subr.mxu0 0.0
      %1128 = vmatpush2.msra.mxu0 0.0
      %1129 = vmatprep.subr.mxu0 0.0
      %1130 = vmatpush2.msra.mxu0 0.0
      %1131 = vmatprep.subr.mxu0 0.0
      %1132 = vmatpush2.msra.mxu0 0.0
      %1133 = vmatprep.subr.mxu0 0.0
      %1134 = vmatpush2.msra.mxu0 0.0
      %1135 = vmatprep.subr.mxu0 0.0
      %1136 = vmatpush2.msra.mxu0 0.0
      %1137 = vmatprep.subr.mxu0 0.0
      %1138 = vmatpush2.msra.mxu0 0.0
      %1139 = vmatprep.subr.mxu0 0.0
      %1140 = vmatpush2.msra.mxu0 0.0
      %1141 = vmatprep.subr.mxu0 0.0
      %1142 = vmatpush2.msra.mxu0 0.0
      %1143 = vmatprep.subr.mxu0 0.0
      %1144 = vmatpush2.msra.mxu0 0.0
      %1145 = vmatprep.subr.mxu0 0.0
      %1146 = vmatpush2.msra.mxu0 0.0
      %1147 = vmatprep.subr.mxu0 0.0
      %1148 = vmatpush2.msra.mxu0 0.0
      %1149 = vmatprep.subr.mxu0 0.0
      %1150 = vmatpush2.msra.mxu0 0.0
      %1151 = vmatprep.subr.mxu0 0.0
      %1152 = vmatpush2.msra.mxu0 0.0
      %1153 = vmatprep.subr.mxu0 0.0
      %1154 = vmatpush2.msra.mxu0 0.0
      %1155 = vmatprep.mubr.f32.mxu0 0.0
      %1156 = vmatmul.mubr.f32.gmra.mxu0 %v625
      %v1157 = vpop.f32.mrf.mxu0
      %v1158 = vadd.f32 %v621, %v1157
      %v1159 = vpop.f32.mrf.mxu0
      %1160 = vdwg.mxu0
      %v1161 = vmax.f32 %v1158, 0.0
      %v1162 = vsel %vm338, %v1161, 0.0
      %s1163 = scalar_lea.vmem %s334, 16
      %1164 = vst [vmem:[%s1163] sm:$0xff] %v1090
      %s1165 = scalar_lea.vmem %s334, 24
      %1166 = vst [vmem:[%s1165] sm:$0xff] %v1162
      %s1167 = smul.u32 2, %s19
      %p1168 = scmp.lt.s32.totalorder %s1167, 3
      %s1169 = scalar_select %p1168, %s1167, 3
      %s1170 = smul.addr %s1169, 2
      %s1171 = smul.addr %s1170, 8
      %s1172 = scalar_lea.vmem %s8, %s1171
      // Predicated region
      $region53: #{_lambda_.1} parent=51 // pred_check
        %p1173 = pneg %p215
      $region54: #{_lambda_.1} parent=51 // pred_check_branch
        %1175 = sbr.rel (%p1173) target = $region56
      $region55: #{_lambda_.1} parent=51 // pred_region
        %s1176 = smul.u32 2, %s19
      $region56: #{_lambda_.1} parent=51 // pred_fallthru
        _
    $region52: #{_lambda_.1} parent=5 // pred_fallthru
      _
    %p1177 = scmp.le.s32.totalorder 2, %s14
    // Predicated region
    $region57: #{_lambda_.1} parent=5 // pred_check
      %p1178 = pneg %p1177
    $region58: #{_lambda_.1} parent=5 // pred_check_branch
      %1180 = sbr.rel (%p1178) target = $region60
    $region59: #{_lambda_.1} parent=5 // pred_region
      %s1181 = ssub.s32 %s14, 2
      // Predicated region
      $region61: #{_lambda_.1} parent=59 // pred_check
        %p1182 = pneg %p221
      $region62: #{_lambda_.1} parent=59 // pred_check_branch
        %1184 = sbr.rel (%p1182) target = $region64
      $region63: #{_lambda_.1} parent=59 // pred_region
        %s1185 = smul.u32 2, %s20
        %p1186 = scmp.lt.s32.totalorder %s1185, 3
        %s1187 = scalar_select %p1186, %s1185, 3
        %s1188 = smul.addr %s1187, 2
        %s1189 = smul.addr %s1188, 8
        %s1190 = scalar_lea.vmem %s8, %s1189
      $region64: #{_lambda_.1} parent=59 // pred_fallthru
        _
    $region60: #{_lambda_.1} parent=5 // pred_fallthru
      _
  $region6: #{_lambda_.1} parent=0 // loop_footer
    %s18 = sadd.s32 1, %s14
  $region7: #{_lambda_.1} parent=0 // loop_footer_branch
    %13 = sbr.rel target = $region3
  $region8: #{_lambda_.1} parent=0 // loop_exit
    _

</llo_original>
